<compile_context>
chip_gen: v5e
topology: v5e:2x2
jax: 0.10.0
libtpu: 0.0.40
codegen_flags: <defaults>
</compile_context>

<pallas_src>
import functools

import jax
import jax.numpy as jnp
from jax import lax
from jax.experimental import pallas as pl
from jax.experimental.pallas import tpu as pltpu


def _round_up(x, m):
    return ((x + m - 1) // m) * m


# ----------------------------------------------------------------------------
# Fused kernel: per (batch, query-block) -> windowed attention over all heads
# + fused unifyheads projection, lane-dense (Tq, e) output.
# ----------------------------------------------------------------------------
def _attn_kernel(xc_ref, xt_ref, wqkv_ref, wu_ref, bu_ref, o_ref, *,
                 heads, s, k, k_pad, t_q, compute_dtype):
    # xc_ref  : (1, heads, t_q,  s)  current query block (all heads)
    # xt_ref  : (1, heads, k_pad, s) the k_pad rows just before the block
    # wqkv_ref: (s, 3s)              [Wq * e^-0.5 | Wk | Wv]
    # wu_ref  : (heads, s, e)        unifyheads weight, split per head
    # bu_ref  : (1, e)               unifyheads bias
    # o_ref   : (1, t_q, e)
    qj = pl.program_id(1)
    w_len = k_pad + t_q
    e = heads * s

    # Key/value window per head = [tail rows | current rows] (both 8-aligned).
    x_win = jnp.concatenate([xt_ref[0], xc_ref[0]], axis=1)          # (h, W, s)

    # Single fused Q/K/V projection for all heads and the whole window.
    proj = jnp.dot(x_win.reshape(heads * w_len, s), wqkv_ref[...],
                   preferred_element_type=jnp.float32)
    proj = proj.reshape(heads, w_len, 3 * s)                          # (h, W, 3s)

    # Band / "before sequence start" masks — shared by all heads, hoisted.
    row = lax.broadcasted_iota(jnp.int32, (t_q, w_len), 0)            # query idx in block
    col = lax.broadcasted_iota(jnp.int32, (t_q, w_len), 1)            # key idx in window
    rel = col - k_pad - row                                           # key pos - query pos
    in_band = (rel <= 0) & (rel > -k)
    before = (qj * t_q + col - k_pad) < 0                             # zero-padded past
    neg = jnp.float32(-1e30)

    acc = jnp.zeros((t_q, e), jnp.float32)
    for h in range(heads):                                            # static unroll
        ph = proj[h]                                                  # (W, 3s)
        q = ph[k_pad:, 0:s]                                           # (t_q, s)
        kw = ph[:, s:2 * s]                                           # (W, s)
        vw = ph[:, 2 * s:]                                            # (W, s)

        # q @ kw.T via dot_general (no materialized transpose).
        sc = lax.dot_general(q.astype(compute_dtype), kw.astype(compute_dtype),
                             (((1,), (1,)), ((), ())),
                             preferred_element_type=jnp.float32)      # (t_q, W)

        # Padded (zero-key) positions contribute logit 0 — matches reference.
        sc = jnp.where(before, 0.0, sc)
        sc = jnp.where(in_band, sc, neg)

        m = jnp.max(sc, axis=-1, keepdims=True)
        ex = jnp.exp(sc - m)
        ex = jnp.where(in_band, ex, 0.0)
        denom = jnp.sum(ex, axis=-1, keepdims=True)
        # zero-key positions stay in the denominator but their value is zero.
        p = jnp.where(before, 0.0, ex) * (1.0 / denom)

        oh = jnp.dot(p.astype(compute_dtype), vw.astype(compute_dtype),
                     preferred_element_type=jnp.float32)              # (t_q, s)

        # Fused unifyheads: accumulate this head's slice of the output matmul.
        acc = acc + jnp.dot(oh.astype(compute_dtype), wu_ref[h],
                            preferred_element_type=jnp.float32)       # (t_q, e)

    o_ref[0] = (acc + bu_ref[...]).astype(o_ref.dtype)


# ----------------------------------------------------------------------------
# Wrapper
# ----------------------------------------------------------------------------
def conv_self_attention(x, params, *, heads, k, q_block=256,
                        compute_dtype=jnp.float32):
    b, t, e = x.shape
    assert e % heads == 0
    s = e // heads
    wq, wk, wv, wu, bu = params   # all in "y = x @ w" orientation

    # Tile geometry: Kpad = history window rounded to 8 sublanes; Tq a
    # multiple of Kpad (so the tail BlockSpec offset is block-aligned).
    k_pad = _round_up(max(k - 1, 1), 8)
    t_q = _round_up(min(_round_up(t, 8), max(q_block, 8)), k_pad)
    t_pad = _round_up(t, t_q)
    nq = t_pad // t_q
    r = t_q // k_pad

    # Fold the e^-1/4 * e^-1/4 softmax scale into Wq once; pack QKV weights.
    wqkv = jnp.concatenate([wq * (float(e) ** -0.5), wk, wv],
                           axis=1).astype(compute_dtype)              # (s, 3s)
    wu3 = wu.reshape(heads, s, e).astype(compute_dtype)               # (h, s, e)
    bu2 = bu.reshape(1, e).astype(jnp.float32)

    # Head-major layout so each grid step DMAs one dense (heads, Tq, s) slab.
    xh = x.reshape(b, t, heads, s).transpose(0, 2, 1, 3)              # (b, h, t, s)
    if t_pad > t:
        xh = jnp.pad(xh, ((0, 0), (0, 0), (0, t_pad - t), (0, 0)))
    x_bh = xh.astype(compute_dtype)                                   # (b, h, t_pad, s)

    kernel = functools.partial(_attn_kernel, heads=heads, s=s, k=k,
                               k_pad=k_pad, t_q=t_q,
                               compute_dtype=compute_dtype)

    out = pl.pallas_call(
        kernel,
        out_shape=jax.ShapeDtypeStruct((b, t_pad, e), jnp.float32),
        grid_spec=pltpu.PrefetchScalarGridSpec(
            num_scalar_prefetch=0,
            grid=(b, nq),
            in_specs=[
                # current query block (all heads)
                pl.BlockSpec((1, heads, t_q, s),
                             lambda bi, qj: (bi, 0, qj, 0)),
                # k_pad rows immediately before the block (clamped at qj==0,
                # those rows are fully masked as "before sequence start")
                pl.BlockSpec((1, heads, k_pad, s),
                             lambda bi, qj: (bi, 0, jnp.maximum(qj * r - 1, 0), 0)),
                pl.BlockSpec((s, 3 * s), lambda bi, qj: (0, 0)),
                pl.BlockSpec((heads, s, e), lambda bi, qj: (0, 0, 0)),
                pl.BlockSpec((1, e), lambda bi, qj: (0, 0)),
            ],
            out_specs=pl.BlockSpec((1, t_q, e), lambda bi, qj: (bi, qj, 0)),
        ),
        compiler_params=pltpu.CompilerParams(
            dimension_semantics=("parallel", "parallel"),
            vmem_limit_bytes=32 * 1024 * 1024,
        ),
    )(x_bh, x_bh, wqkv, wu3, bu2)

    return out[:, :t, :] if t_pad > t else out


# ----------------------------------------------------------------------------
# Pure-JAX reference (mirrors the PyTorch forward) for a sanity check.
# ----------------------------------------------------------------------------
def _reference(x, params, *, heads, k):
    wq, wk, wv, wu, bu = params
    b, t, e = x.shape
    s = e // heads
    tp = t + k - 1
    xh = x.reshape(b, t, heads, s)
    xp = jnp.pad(xh, ((0, 0), (k - 1, 0), (0, 0), (0, 0)))
    scale = 1.0 / (float(e) ** 0.25)
    q = jnp.einsum("bths,sd->bhtd", xh, wq) * scale
    kk = jnp.einsum("bphs,sd->bhpd", xp, wk) * scale
    v = jnp.einsum("bphs,sd->bhpd", xp, wv)
    scores = jnp.einsum("bhtd,bhpd->bhtp", q, kk)
    row = jnp.arange(t)[:, None]
    col = jnp.arange(tp)[None, :]
    band = (col >= row) & (col < row + k)
    scores = jnp.where(band, scores, -jnp.inf)
    p = jax.nn.softmax(scores, axis=-1)
    p = jnp.where(band, p, 0.0)
    out = jnp.einsum("bhtp,bhpd->bthd", p, v).reshape(b, t, e)
    return out @ wu + bu


def _make_params(key, emb, heads):
    s = emb // heads
    kq, kk_, kv, ku, kb = jax.random.split(key, 5)
    wq = jax.random.normal(kq, (s, s), dtype=jnp.float32) / jnp.sqrt(s)
    wk = jax.random.normal(kk_, (s, s), dtype=jnp.float32) / jnp.sqrt(s)
    wv = jax.random.normal(kv, (s, s), dtype=jnp.float32) / jnp.sqrt(s)
    wu = jax.random.normal(ku, (emb, emb), dtype=jnp.float32) / jnp.sqrt(emb)
    bu = jax.random.normal(kb, (emb,), dtype=jnp.float32) * 0.01
    return (wq, wk, wv, wu, bu)


if __name__ == "__main__":
    key = jax.random.PRNGKey(0)
    kp, kx1, kx2 = jax.random.split(key, 3)

    emb, heads, k = 32, 4, 8
    params = _make_params(kp, emb, heads)

    # Case 1: single query block.
    b1, t1 = 2, 16
    x1 = jax.random.normal(kx1, (b1, t1, emb), dtype=jnp.float32)
    out1 = jax.block_until_ready(conv_self_attention(x1, params, heads=heads, k=k))
    ref1 = _reference(x1, params, heads=heads, k=k)
    assert out1.shape == (b1, t1, emb)
    assert jnp.allclose(out1, ref1, atol=1e-3, rtol=1e-3), "case 1 mismatch"

    # Case 2: multiple query blocks + sequence padding (t not a block multiple).
    b2, t2 = 1, 40
    x2 = jax.random.normal(kx2, (b2, t2, emb), dtype=jnp.float32)
    out2 = jax.block_until_ready(
        conv_self_attention(x2, params, heads=heads, k=k, q_block=16))
    ref2 = _reference(x2, params, heads=heads, k=k)
    assert out2.shape == (b2, t2, emb)
    assert jnp.allclose(out2, ref2, atol=1e-3, rtol=1e-3), "case 2 mismatch"

    print("KERNEL_OK")
</pallas_src>

<mosaic_0001>
module attributes {stable_mosaic.version = 11 : i64} {
  func.func @_attn_kernel(%arg0: i32, %arg1: i32, %arg2: memref<1x4x16x8xf32, #tpu.memory_space<vmem>>, %arg3: memref<1x4x8x8xf32, #tpu.memory_space<vmem>>, %arg4: memref<8x24xf32, #tpu.memory_space<vmem>>, %arg5: memref<4x8x32xf32, #tpu.memory_space<vmem>>, %arg6: memref<1x32xf32, #tpu.memory_space<vmem>>, %arg7: memref<1x16x32xf32, #tpu.memory_space<vmem>>) attributes {dimension_semantics = [#tpu.dimension_semantics<parallel>, #tpu.dimension_semantics<parallel>], iteration_bounds = array<i64: 2, 1>, scalar_prefetch = 0 : i64, scratch_operands = 0 : i64, tpu.core_type = #tpu.core_type<tc>, window_params = [{transform_indices = @transform_0, window_bounds = array<i64: 1, 4, 16, 8>}, {transform_indices = @transform_1, window_bounds = array<i64: 1, 4, 8, 8>}, {pipeline_mode = #tpu.pipeline_mode<synchronous>, transform_indices = @transform_2, window_bounds = array<i64: 8, 24>}, {pipeline_mode = #tpu.pipeline_mode<synchronous>, transform_indices = @transform_3, window_bounds = array<i64: 4, 8, 32>}, {pipeline_mode = #tpu.pipeline_mode<synchronous>, transform_indices = @transform_4, window_bounds = array<i64: 1, 32>}, {transform_indices = @transform_5, window_bounds = array<i64: 1, 16, 32>}]} {
    %c0 = arith.constant 0 : index
    %c0_0 = arith.constant 0 : index
    %c0_1 = arith.constant 0 : index
    %c0_2 = arith.constant 0 : index
    %0 = vector.load %arg3[%c0, %c0_0, %c0_1, %c0_2] : memref<1x4x8x8xf32, #tpu.memory_space<vmem>>, vector<1x4x8x8xf32>
    %1 = vector.shape_cast %0 : vector<1x4x8x8xf32> to vector<4x8x8xf32>
    %c0_3 = arith.constant 0 : index
    %c0_4 = arith.constant 0 : index
    %c0_5 = arith.constant 0 : index
    %c0_6 = arith.constant 0 : index
    %2 = vector.load %arg2[%c0_3, %c0_4, %c0_5, %c0_6] : memref<1x4x16x8xf32, #tpu.memory_space<vmem>>, vector<1x4x16x8xf32>
    %3 = vector.shape_cast %2 : vector<1x4x16x8xf32> to vector<4x16x8xf32>
    %4 = tpu.concatenate %1, %3 in 1 : vector<4x8x8xf32>, vector<4x16x8xf32> -> vector<4x24x8xf32>
    %5 = vector.shape_cast %4 : vector<4x24x8xf32> to vector<96x8xf32>
    %c0_7 = arith.constant 0 : index
    %c0_8 = arith.constant 0 : index
    %6 = vector.load %arg4[%c0_7, %c0_8] : memref<8x24xf32, #tpu.memory_space<vmem>>, vector<8x24xf32>
    %cst = arith.constant dense<0.000000e+00> : vector<96x24xf32>
    %7 = tpu.matmul %5, %6, %cst {dimension_numbers = #tpu.dot_dimension_numbers<[1], [0], [0], [1], [0, 0, 1, 1], [], []>} : vector<96x8xf32>, vector<8x24xf32>, vector<96x24xf32> -> vector<96x24xf32>
    %8 = vector.shape_cast %7 : vector<96x24xf32> to vector<4x24x24xf32>
    %9 = tpu.iota {dimensions = array<i32: 0>} : vector<16x24xi32>
    %10 = tpu.iota {dimensions = array<i32: 1>} : vector<16x24xi32>
    %c8_i32 = arith.constant 8 : i32
    %11 = vector.broadcast %c8_i32 : i32 to vector<16x24xi32>
    %12 = arith.subi %10, %11 : vector<16x24xi32>
    %13 = arith.subi %12, %9 : vector<16x24xi32>
    %c0_i32 = arith.constant 0 : i32
    %14 = vector.broadcast %c0_i32 : i32 to vector<16x24xi32>
    %15 = arith.cmpi sle, %13, %14 : vector<16x24xi32>
    %c-8_i32 = arith.constant -8 : i32
    %16 = vector.broadcast %c-8_i32 : i32 to vector<16x24xi32>
    %17 = arith.cmpi sgt, %13, %16 : vector<16x24xi32>
    %18 = arith.andi %15, %17 : vector<16x24xi1>
    %c16_i32 = arith.constant 16 : i32
    %19 = arith.muli %arg1, %c16_i32 : i32
    %20 = vector.broadcast %19 : i32 to vector<16x24xi32>
    %21 = arith.addi %20, %10 : vector<16x24xi32>
    %c8_i32_9 = arith.constant 8 : i32
    %22 = vector.broadcast %c8_i32_9 : i32 to vector<16x24xi32>
    %23 = arith.subi %21, %22 : vector<16x24xi32>
    %c0_i32_10 = arith.constant 0 : i32
    %24 = vector.broadcast %c0_i32_10 : i32 to vector<16x24xi32>
    %25 = arith.cmpi slt, %23, %24 : vector<16x24xi32>
    %cst_11 = arith.constant 0.000000e+00 : f32
    %26 = vector.broadcast %cst_11 : f32 to vector<16x32xf32>
    %27 = vector.extract_strided_slice %8 {offsets = [0, 0, 0], sizes = [1, 24, 24], strides = [1, 1, 1]} : vector<4x24x24xf32> to vector<1x24x24xf32>
    %28 = vector.shape_cast %27 : vector<1x24x24xf32> to vector<24x24xf32>
    %29 = vector.extract_strided_slice %28 {offsets = [8, 0], sizes = [16, 8], strides = [1, 1]} : vector<24x24xf32> to vector<16x8xf32>
    %30 = vector.extract_strided_slice %28 {offsets = [0, 8], sizes = [24, 8], strides = [1, 1]} : vector<24x24xf32> to vector<24x8xf32>
    %31 = vector.extract_strided_slice %28 {offsets = [0, 16], sizes = [24, 8], strides = [1, 1]} : vector<24x24xf32> to vector<24x8xf32>
    %cst_12 = arith.constant dense<0.000000e+00> : vector<16x24xf32>
    %32 = tpu.matmul %29, %30, %cst_12 {dimension_numbers = #tpu.dot_dimension_numbers<[1], [1], [0], [0], [0, 0, 1, 0], [], []>} : vector<16x8xf32>, vector<24x8xf32>, vector<16x24xf32> -> vector<16x24xf32>
    %cst_13 = arith.constant 0.000000e+00 : f32
    %33 = vector.broadcast %cst_13 : f32 to vector<16x24xf32>
    %34 = arith.select %25, %33, %32 : vector<16x24xi1>, vector<16x24xf32>
    %cst_14 = arith.constant -1.000000e+30 : f32
    %35 = vector.broadcast %cst_14 : f32 to vector<16x24xf32>
    %36 = arith.select %18, %34, %35 : vector<16x24xi1>, vector<16x24xf32>
    %cst_15 = arith.constant dense<0xFF800000> : vector<16xf32>
    %37 = vector.multi_reduction <maximumf>, %36, %cst_15 [1] : vector<16x24xf32> to vector<16xf32>
    %38 = vector.shape_cast %37 : vector<16xf32> to vector<16x1xf32>
    %39 = vector.broadcast %38 : vector<16x1xf32> to vector<16x24xf32>
    %40 = arith.subf %36, %39 : vector<16x24xf32>
    %41 = math.exp %40 : vector<16x24xf32>
    %cst_16 = arith.constant 0.000000e+00 : f32
    %42 = vector.broadcast %cst_16 : f32 to vector<16x24xf32>
    %43 = arith.select %18, %41, %42 : vector<16x24xi1>, vector<16x24xf32>
    %cst_17 = arith.constant dense<0.000000e+00> : vector<16xf32>
    %44 = vector.multi_reduction <add>, %43, %cst_17 [1] : vector<16x24xf32> to vector<16xf32>
    %45 = vector.shape_cast %44 : vector<16xf32> to vector<16x1xf32>
    %cst_18 = arith.constant 0.000000e+00 : f32
    %46 = vector.broadcast %cst_18 : f32 to vector<16x24xf32>
    %47 = arith.select %25, %46, %43 : vector<16x24xi1>, vector<16x24xf32>
    %cst_19 = arith.constant 1.000000e+00 : f32
    %48 = vector.broadcast %cst_19 : f32 to vector<16x1xf32>
    %49 = arith.divf %48, %45 : vector<16x1xf32>
    %50 = vector.broadcast %49 : vector<16x1xf32> to vector<16x24xf32>
    %51 = arith.mulf %47, %50 : vector<16x24xf32>
    %cst_20 = arith.constant dense<0.000000e+00> : vector<16x8xf32>
    %52 = tpu.matmul %51, %31, %cst_20 {dimension_numbers = #tpu.dot_dimension_numbers<[1], [0], [0], [1], [0, 0, 1, 1], [], []>} : vector<16x24xf32>, vector<24x8xf32>, vector<16x8xf32> -> vector<16x8xf32>
    %c0_21 = arith.constant 0 : index
    %c0_22 = arith.constant 0 : index
    %c0_23 = arith.constant 0 : index
    %53 = vector.load %arg5[%c0_21, %c0_22, %c0_23] : memref<4x8x32xf32, #tpu.memory_space<vmem>>, vector<1x8x32xf32>
    %54 = vector.shape_cast %53 : vector<1x8x32xf32> to vector<8x32xf32>
    %cst_24 = arith.constant dense<0.000000e+00> : vector<16x32xf32>
    %55 = tpu.matmul %52, %54, %cst_24 {dimension_numbers = #tpu.dot_dimension_numbers<[1], [0], [0], [1], [0, 0, 1, 1], [], []>} : vector<16x8xf32>, vector<8x32xf32>, vector<16x32xf32> -> vector<16x32xf32>
    %56 = arith.addf %26, %55 : vector<16x32xf32>
    %57 = vector.extract_strided_slice %8 {offsets = [1, 0, 0], sizes = [1, 24, 24], strides = [1, 1, 1]} : vector<4x24x24xf32> to vector<1x24x24xf32>
    %58 = vector.shape_cast %57 : vector<1x24x24xf32> to vector<24x24xf32>
    %59 = vector.extract_strided_slice %58 {offsets = [8, 0], sizes = [16, 8], strides = [1, 1]} : vector<24x24xf32> to vector<16x8xf32>
    %60 = vector.extract_strided_slice %58 {offsets = [0, 8], sizes = [24, 8], strides = [1, 1]} : vector<24x24xf32> to vector<24x8xf32>
    %61 = vector.extract_strided_slice %58 {offsets = [0, 16], sizes = [24, 8], strides = [1, 1]} : vector<24x24xf32> to vector<24x8xf32>
    %cst_25 = arith.constant dense<0.000000e+00> : vector<16x24xf32>
    %62 = tpu.matmul %59, %60, %cst_25 {dimension_numbers = #tpu.dot_dimension_numbers<[1], [1], [0], [0], [0, 0, 1, 0], [], []>} : vector<16x8xf32>, vector<24x8xf32>, vector<16x24xf32> -> vector<16x24xf32>
    %cst_26 = arith.constant 0.000000e+00 : f32
    %63 = vector.broadcast %cst_26 : f32 to vector<16x24xf32>
    %64 = arith.select %25, %63, %62 : vector<16x24xi1>, vector<16x24xf32>
    %cst_27 = arith.constant -1.000000e+30 : f32
    %65 = vector.broadcast %cst_27 : f32 to vector<16x24xf32>
    %66 = arith.select %18, %64, %65 : vector<16x24xi1>, vector<16x24xf32>
    %cst_28 = arith.constant dense<0xFF800000> : vector<16xf32>
    %67 = vector.multi_reduction <maximumf>, %66, %cst_28 [1] : vector<16x24xf32> to vector<16xf32>
    %68 = vector.shape_cast %67 : vector<16xf32> to vector<16x1xf32>
    %69 = vector.broadcast %68 : vector<16x1xf32> to vector<16x24xf32>
    %70 = arith.subf %66, %69 : vector<16x24xf32>
    %71 = math.exp %70 : vector<16x24xf32>
    %cst_29 = arith.constant 0.000000e+00 : f32
    %72 = vector.broadcast %cst_29 : f32 to vector<16x24xf32>
    %73 = arith.select %18, %71, %72 : vector<16x24xi1>, vector<16x24xf32>
    %cst_30 = arith.constant dense<0.000000e+00> : vector<16xf32>
    %74 = vector.multi_reduction <add>, %73, %cst_30 [1] : vector<16x24xf32> to vector<16xf32>
    %75 = vector.shape_cast %74 : vector<16xf32> to vector<16x1xf32>
    %cst_31 = arith.constant 0.000000e+00 : f32
    %76 = vector.broadcast %cst_31 : f32 to vector<16x24xf32>
    %77 = arith.select %25, %76, %73 : vector<16x24xi1>, vector<16x24xf32>
    %cst_32 = arith.constant 1.000000e+00 : f32
    %78 = vector.broadcast %cst_32 : f32 to vector<16x1xf32>
    %79 = arith.divf %78, %75 : vector<16x1xf32>
    %80 = vector.broadcast %79 : vector<16x1xf32> to vector<16x24xf32>
    %81 = arith.mulf %77, %80 : vector<16x24xf32>
    %cst_33 = arith.constant dense<0.000000e+00> : vector<16x8xf32>
    %82 = tpu.matmul %81, %61, %cst_33 {dimension_numbers = #tpu.dot_dimension_numbers<[1], [0], [0], [1], [0, 0, 1, 1], [], []>} : vector<16x24xf32>, vector<24x8xf32>, vector<16x8xf32> -> vector<16x8xf32>
    %c1 = arith.constant 1 : index
    %c0_34 = arith.constant 0 : index
    %c0_35 = arith.constant 0 : index
    %83 = vector.load %arg5[%c1, %c0_34, %c0_35] : memref<4x8x32xf32, #tpu.memory_space<vmem>>, vector<1x8x32xf32>
    %84 = vector.shape_cast %83 : vector<1x8x32xf32> to vector<8x32xf32>
    %cst_36 = arith.constant dense<0.000000e+00> : vector<16x32xf32>
    %85 = tpu.matmul %82, %84, %cst_36 {dimension_numbers = #tpu.dot_dimension_numbers<[1], [0], [0], [1], [0, 0, 1, 1], [], []>} : vector<16x8xf32>, vector<8x32xf32>, vector<16x32xf32> -> vector<16x32xf32>
    %86 = arith.addf %56, %85 : vector<16x32xf32>
    %87 = vector.extract_strided_slice %8 {offsets = [2, 0, 0], sizes = [1, 24, 24], strides = [1, 1, 1]} : vector<4x24x24xf32> to vector<1x24x24xf32>
    %88 = vector.shape_cast %87 : vector<1x24x24xf32> to vector<24x24xf32>
    %89 = vector.extract_strided_slice %88 {offsets = [8, 0], sizes = [16, 8], strides = [1, 1]} : vector<24x24xf32> to vector<16x8xf32>
    %90 = vector.extract_strided_slice %88 {offsets = [0, 8], sizes = [24, 8], strides = [1, 1]} : vector<24x24xf32> to vector<24x8xf32>
    %91 = vector.extract_strided_slice %88 {offsets = [0, 16], sizes = [24, 8], strides = [1, 1]} : vector<24x24xf32> to vector<24x8xf32>
    %cst_37 = arith.constant dense<0.000000e+00> : vector<16x24xf32>
    %92 = tpu.matmul %89, %90, %cst_37 {dimension_numbers = #tpu.dot_dimension_numbers<[1], [1], [0], [0], [0, 0, 1, 0], [], []>} : vector<16x8xf32>, vector<24x8xf32>, vector<16x24xf32> -> vector<16x24xf32>
    %cst_38 = arith.constant 0.000000e+00 : f32
    %93 = vector.broadcast %cst_38 : f32 to vector<16x24xf32>
    %94 = arith.select %25, %93, %92 : vector<16x24xi1>, vector<16x24xf32>
    %cst_39 = arith.constant -1.000000e+30 : f32
    %95 = vector.broadcast %cst_39 : f32 to vector<16x24xf32>
    %96 = arith.select %18, %94, %95 : vector<16x24xi1>, vector<16x24xf32>
    %cst_40 = arith.constant dense<0xFF800000> : vector<16xf32>
    %97 = vector.multi_reduction <maximumf>, %96, %cst_40 [1] : vector<16x24xf32> to vector<16xf32>
    %98 = vector.shape_cast %97 : vector<16xf32> to vector<16x1xf32>
    %99 = vector.broadcast %98 : vector<16x1xf32> to vector<16x24xf32>
    %100 = arith.subf %96, %99 : vector<16x24xf32>
    %101 = math.exp %100 : vector<16x24xf32>
    %cst_41 = arith.constant 0.000000e+00 : f32
    %102 = vector.broadcast %cst_41 : f32 to vector<16x24xf32>
    %103 = arith.select %18, %101, %102 : vector<16x24xi1>, vector<16x24xf32>
    %cst_42 = arith.constant dense<0.000000e+00> : vector<16xf32>
    %104 = vector.multi_reduction <add>, %103, %cst_42 [1] : vector<16x24xf32> to vector<16xf32>
    %105 = vector.shape_cast %104 : vector<16xf32> to vector<16x1xf32>
    %cst_43 = arith.constant 0.000000e+00 : f32
    %106 = vector.broadcast %cst_43 : f32 to vector<16x24xf32>
    %107 = arith.select %25, %106, %103 : vector<16x24xi1>, vector<16x24xf32>
    %cst_44 = arith.constant 1.000000e+00 : f32
    %108 = vector.broadcast %cst_44 : f32 to vector<16x1xf32>
    %109 = arith.divf %108, %105 : vector<16x1xf32>
    %110 = vector.broadcast %109 : vector<16x1xf32> to vector<16x24xf32>
    %111 = arith.mulf %107, %110 : vector<16x24xf32>
    %cst_45 = arith.constant dense<0.000000e+00> : vector<16x8xf32>
    %112 = tpu.matmul %111, %91, %cst_45 {dimension_numbers = #tpu.dot_dimension_numbers<[1], [0], [0], [1], [0, 0, 1, 1], [], []>} : vector<16x24xf32>, vector<24x8xf32>, vector<16x8xf32> -> vector<16x8xf32>
    %c2 = arith.constant 2 : index
    %c0_46 = arith.constant 0 : index
    %c0_47 = arith.constant 0 : index
    %113 = vector.load %arg5[%c2, %c0_46, %c0_47] : memref<4x8x32xf32, #tpu.memory_space<vmem>>, vector<1x8x32xf32>
    %114 = vector.shape_cast %113 : vector<1x8x32xf32> to vector<8x32xf32>
    %cst_48 = arith.constant dense<0.000000e+00> : vector<16x32xf32>
    %115 = tpu.matmul %112, %114, %cst_48 {dimension_numbers = #tpu.dot_dimension_numbers<[1], [0], [0], [1], [0, 0, 1, 1], [], []>} : vector<16x8xf32>, vector<8x32xf32>, vector<16x32xf32> -> vector<16x32xf32>
    %116 = arith.addf %86, %115 : vector<16x32xf32>
    %117 = vector.extract_strided_slice %8 {offsets = [3, 0, 0], sizes = [1, 24, 24], strides = [1, 1, 1]} : vector<4x24x24xf32> to vector<1x24x24xf32>
    %118 = vector.shape_cast %117 : vector<1x24x24xf32> to vector<24x24xf32>
    %119 = vector.extract_strided_slice %118 {offsets = [8, 0], sizes = [16, 8], strides = [1, 1]} : vector<24x24xf32> to vector<16x8xf32>
    %120 = vector.extract_strided_slice %118 {offsets = [0, 8], sizes = [24, 8], strides = [1, 1]} : vector<24x24xf32> to vector<24x8xf32>
    %121 = vector.extract_strided_slice %118 {offsets = [0, 16], sizes = [24, 8], strides = [1, 1]} : vector<24x24xf32> to vector<24x8xf32>
    %cst_49 = arith.constant dense<0.000000e+00> : vector<16x24xf32>
    %122 = tpu.matmul %119, %120, %cst_49 {dimension_numbers = #tpu.dot_dimension_numbers<[1], [1], [0], [0], [0, 0, 1, 0], [], []>} : vector<16x8xf32>, vector<24x8xf32>, vector<16x24xf32> -> vector<16x24xf32>
    %cst_50 = arith.constant 0.000000e+00 : f32
    %123 = vector.broadcast %cst_50 : f32 to vector<16x24xf32>
    %124 = arith.select %25, %123, %122 : vector<16x24xi1>, vector<16x24xf32>
    %cst_51 = arith.constant -1.000000e+30 : f32
    %125 = vector.broadcast %cst_51 : f32 to vector<16x24xf32>
    %126 = arith.select %18, %124, %125 : vector<16x24xi1>, vector<16x24xf32>
    %cst_52 = arith.constant dense<0xFF800000> : vector<16xf32>
    %127 = vector.multi_reduction <maximumf>, %126, %cst_52 [1] : vector<16x24xf32> to vector<16xf32>
    %128 = vector.shape_cast %127 : vector<16xf32> to vector<16x1xf32>
    %129 = vector.broadcast %128 : vector<16x1xf32> to vector<16x24xf32>
    %130 = arith.subf %126, %129 : vector<16x24xf32>
    %131 = math.exp %130 : vector<16x24xf32>
    %cst_53 = arith.constant 0.000000e+00 : f32
    %132 = vector.broadcast %cst_53 : f32 to vector<16x24xf32>
    %133 = arith.select %18, %131, %132 : vector<16x24xi1>, vector<16x24xf32>
    %cst_54 = arith.constant dense<0.000000e+00> : vector<16xf32>
    %134 = vector.multi_reduction <add>, %133, %cst_54 [1] : vector<16x24xf32> to vector<16xf32>
    %135 = vector.shape_cast %134 : vector<16xf32> to vector<16x1xf32>
    %cst_55 = arith.constant 0.000000e+00 : f32
    %136 = vector.broadcast %cst_55 : f32 to vector<16x24xf32>
    %137 = arith.select %25, %136, %133 : vector<16x24xi1>, vector<16x24xf32>
    %cst_56 = arith.constant 1.000000e+00 : f32
    %138 = vector.broadcast %cst_56 : f32 to vector<16x1xf32>
    %139 = arith.divf %138, %135 : vector<16x1xf32>
    %140 = vector.broadcast %139 : vector<16x1xf32> to vector<16x24xf32>
    %141 = arith.mulf %137, %140 : vector<16x24xf32>
    %cst_57 = arith.constant dense<0.000000e+00> : vector<16x8xf32>
    %142 = tpu.matmul %141, %121, %cst_57 {dimension_numbers = #tpu.dot_dimension_numbers<[1], [0], [0], [1], [0, 0, 1, 1], [], []>} : vector<16x24xf32>, vector<24x8xf32>, vector<16x8xf32> -> vector<16x8xf32>
    %c3 = arith.constant 3 : index
    %c0_58 = arith.constant 0 : index
    %c0_59 = arith.constant 0 : index
    %143 = vector.load %arg5[%c3, %c0_58, %c0_59] : memref<4x8x32xf32, #tpu.memory_space<vmem>>, vector<1x8x32xf32>
    %144 = vector.shape_cast %143 : vector<1x8x32xf32> to vector<8x32xf32>
    %cst_60 = arith.constant dense<0.000000e+00> : vector<16x32xf32>
    %145 = tpu.matmul %142, %144, %cst_60 {dimension_numbers = #tpu.dot_dimension_numbers<[1], [0], [0], [1], [0, 0, 1, 1], [], []>} : vector<16x8xf32>, vector<8x32xf32>, vector<16x32xf32> -> vector<16x32xf32>
    %146 = arith.addf %116, %145 : vector<16x32xf32>
    %c0_61 = arith.constant 0 : index
    %c0_62 = arith.constant 0 : index
    %147 = vector.load %arg6[%c0_61, %c0_62] : memref<1x32xf32, #tpu.memory_space<vmem>>, vector<1x32xf32>
    %148 = vector.broadcast %147 : vector<1x32xf32> to vector<16x32xf32>
    %149 = arith.addf %146, %148 : vector<16x32xf32>
    %c0_63 = arith.constant 0 : index
    %c0_64 = arith.constant 0 : index
    %c0_65 = arith.constant 0 : index
    %150 = vector.load %arg7[%c0_63, %c0_64, %c0_65] : memref<1x16x32xf32, #tpu.memory_space<vmem>>, vector<1x16x32xf32>
    %151 = vector.shape_cast %150 : vector<1x16x32xf32> to vector<16x32xf32>
    %152 = vector.shape_cast %149 : vector<16x32xf32> to vector<1x16x32xf32>
    tpu.vector_store %arg7[%c0_63, %c0_64, %c0_65], %152 {strides = array<i32>} : memref<1x16x32xf32, #tpu.memory_space<vmem>>, vector<1x16x32xf32>,
    return
  }
  func.func @transform_0(%arg0: i32, %arg1: i32) -> (i32, i32, i32, i32) {
    %c0_i32 = arith.constant 0 : i32
    %c0_i32_0 = arith.constant 0 : i32
    %c0_i32_1 = arith.constant 0 : i32
    return %arg0, %c0_i32, %arg1, %c0_i32_0 : i32, i32, i32, i32
  }
  func.func @transform_1(%arg0: i32, %arg1: i32) -> (i32, i32, i32, i32) {
    %c2_i32 = arith.constant 2 : i32
    %0 = arith.muli %arg1, %c2_i32 : i32
    %c1_i32 = arith.constant 1 : i32
    %1 = arith.subi %0, %c1_i32 : i32
    %c0_i32 = arith.constant 0 : i32
    %2 = arith.maxsi %1, %c0_i32 : i32
    %c0_i32_0 = arith.constant 0 : i32
    %c0_i32_1 = arith.constant 0 : i32
    %c0_i32_2 = arith.constant 0 : i32
    return %arg0, %c0_i32_0, %2, %c0_i32_1 : i32, i32, i32, i32
  }
  func.func @transform_2(%arg0: i32, %arg1: i32) -> (i32, i32) {
    %c0_i32 = arith.constant 0 : i32
    %c0_i32_0 = arith.constant 0 : i32
    %c0_i32_1 = arith.constant 0 : i32
    return %c0_i32, %c0_i32_0 : i32, i32
  }
  func.func @transform_3(%arg0: i32, %arg1: i32) -> (i32, i32, i32) {
    %c0_i32 = arith.constant 0 : i32
    %c0_i32_0 = arith.constant 0 : i32
    %c0_i32_1 = arith.constant 0 : i32
    %c0_i32_2 = arith.constant 0 : i32
    return %c0_i32, %c0_i32_0, %c0_i32_1 : i32, i32, i32
  }
  func.func @transform_4(%arg0: i32, %arg1: i32) -> (i32, i32) {
    %c0_i32 = arith.constant 0 : i32
    %c0_i32_0 = arith.constant 0 : i32
    %c0_i32_1 = arith.constant 0 : i32
    return %c0_i32, %c0_i32_0 : i32, i32
  }
  func.func @transform_5(%arg0: i32, %arg1: i32) -> (i32, i32, i32) {
    %c0_i32 = arith.constant 0 : i32
    %c0_i32_0 = arith.constant 0 : i32
    return %arg0, %arg1, %c0_i32 : i32, i32, i32
  }
}

</mosaic_0001>

<llo_original>
// kernel: tpu_custom_call.1
$region0: #{tpu_custom_call.1}
  #allocation0 [shape = 'u32[]', space=smem, size = 0x4, offset = 0x4, fixed_abs, tag = 'smem constant byte address 0x4 - core index']
  #allocation1 [shape = 'u32[72,128]{1,0:T(1,128)}', space=vmem, size = 0x9000, scoped, tag = 'internal scratch']
  %s0 = inlined_call_operand.vmem [shape: f32[2,4,16,8], index: 0, kind: input, shape index: {}]
  %s1 = inlined_call_operand.vmem [shape: f32[2,4,16,8], index: 1, kind: input, shape index: {}]
  %s2 = inlined_call_operand.vmem [shape: f32[8,24], index: 2, kind: input, shape index: {}]
  %s3 = inlined_call_operand.vmem [shape: f32[4,8,32], index: 3, kind: input, shape index: {}]
  %s4 = inlined_call_operand.vmem [shape: f32[1,32], index: 4, kind: input, shape index: {}]
  %s5 = inlined_call_operand.hbm [shape: f32[2,16,32], index: 5, kind: output, shape index: {}]
  %s6 = sld [smem:[#allocation0]]
  $region91: #{tpu_custom_call.1} parent=0
    _
  %s8 = ssub.s32 1, %s6
  %s9 = scalar_select 0, %s8, %s6
  $region1: #{tpu_custom_call.1} parent=0
    #allocation2 [shape = 'u8[32768]{0}', space=vmem, size = 0x8000, scoped, tag = 'input window, operand 1']
    #allocation3 [shape = 'u8[16384]{0}', space=vmem, size = 0x4000, scoped, tag = 'output window, operand 0']
    #allocation4 [shape = 's32[2]{0}', space=sflag, size = 0x8, scoped, tag = 'scoped memory for tpu_custom_call.1']
    %10 = vsyncpa [#allocation4], 0
    %s11 = scalar_lea.sflag [#allocation4], 1
    %12 = vsyncpa %s11, 0
    loop: start=0, step=1, limit=4
    $region2: #{tpu_custom_call.1} parent=1 // loop_pre_header
      _
    $region3: #{tpu_custom_call.1} parent=1 // loop_header
      %s14 = sphi 0, %s18
      %p15 = scmp.ge.s32.totalorder %s14, 4
      %s21 = sphi 0, %s33
      %s22 = sphi 0, %s29
      %s23 = sphi 0, %s21
      %s24 = sphi 0, %s22
      %s25 = sphi 0, %s23
      %s26 = sphi 0, %s24
      %s38 = sphi 0, %s40
      %s41 = sphi 0, %s38
      %s42 = sphi 0, %s41
      %s58 = sphi 0, %s42
      %s74 = sphi 0, %s76
      %s77 = sphi 0, %s74
      %s78 = sphi 0, %s77
      %s94 = sphi 0, %s78
      %s98 = sphi 0, %s98
      %s100 = sphi 0, %s98
      %s101 = sphi 0, %s100
      %s115 = sphi 0, %s101
      %s119 = sphi 0, %s119
      %s121 = sphi 0, %s119
      %s122 = sphi 0, %s121
      %s136 = sphi 0, %s122
      %s140 = sphi 0, %s140
      %s142 = sphi 0, %s140
      %s143 = sphi 0, %s142
      %s157 = sphi 0, %s143
      %s165 = sphi 0, %s167
      %s168 = sphi 0, %s165
      %s169 = sphi 0, %s168
      %s185 = sphi 0, %s169
    $region4: #{tpu_custom_call.1} parent=1 // loop_header_branch
      %17 = sbr.rel (%p15) target = $region8
    $region5: #{tpu_custom_call.1} parent=1 // loop_body
      %s19 = ssub.s32 %s14, 1
      %s20 = ssub.s32 %s14, 2
      %s27 = sadd.s32 1, %s22
      %p28 = scmp.ge.s32.totalorder %s27, 1
      %s29 = scalar_select %p28, 0, %s27
      %s30 = sadd.s32 1, %s21
      %s31 = scalar_select %p28, %s30, %s21
      %p32 = scmp.ge.s32.totalorder %s31, 2
      %s33 = scalar_select %p32, 0, %s31
      %s34 = ssub.s32 %s21, %s33
      %s35 = ssub.s32 %s22, %s29
      %s36 = sor.u32 %s34, %s35
      %p37 = scmp.eq.s32.totalorder %s36, 0
      %s39 = sadd.s32 %s38, 1
      %s40 = scalar_select %p37, %s38, %s39
      %p43 = pneg %p37
      %p44 = scmp.eq.s32.totalorder %s14, 1
      %p45 = por %p43, %p44
      %p46 = scmp.ne.s32.totalorder %s38, %s41
      %p47 = scmp.eq.s32.totalorder %s14, 0
      %p48 = por %p46, %p47
      %p49 = scmp.ne.s32.totalorder %s38, %s41
      %p50 = scmp.eq.s32.totalorder %s19, 1
      %p51 = por %p49, %p50
      %p52 = scmp.ne.s32.totalorder %s41, %s42
      %p53 = scmp.eq.s32.totalorder %s19, 0
      %p54 = por %p52, %p53
      %p55 = scmp.ne.s32.totalorder %s41, %s42
      %p56 = scmp.eq.s32.totalorder %s20, 1
      %p57 = por %p55, %p56
      %p59 = scmp.ne.s32.totalorder %s42, %s58
      %p60 = scmp.eq.s32.totalorder %s20, 0
      %p61 = por %p59, %p60
      %s62 = smul.u32 %s22, 2
      %s63 = ssub.s32 %s62, 1
      %p64 = scmp.gt.s32.totalorder %s63, 0
      %s65 = scalar_select %p64, %s63, 0
      %s66 = smul.u32 %s29, 2
      %s67 = ssub.s32 %s66, 1
      %p68 = scmp.gt.s32.totalorder %s67, 0
      %s69 = scalar_select %p68, %s67, 0
      %s70 = ssub.s32 %s21, %s33
      %s71 = ssub.s32 %s65, %s69
      %s72 = sor.u32 %s70, %s71
      %p73 = scmp.eq.s32.totalorder %s72, 0
      %s75 = sadd.s32 %s74, 1
      %s76 = scalar_select %p73, %s74, %s75
      %p79 = pneg %p73
      %p80 = scmp.eq.s32.totalorder %s14, 1
      %p81 = por %p79, %p80
      %p82 = scmp.ne.s32.totalorder %s74, %s77
      %p83 = scmp.eq.s32.totalorder %s14, 0
      %p84 = por %p82, %p83
      %p85 = scmp.ne.s32.totalorder %s74, %s77
      %p86 = scmp.eq.s32.totalorder %s19, 1
      %p87 = por %p85, %p86
      %p88 = scmp.ne.s32.totalorder %s77, %s78
      %p89 = scmp.eq.s32.totalorder %s19, 0
      %p90 = por %p88, %p89
      %p91 = scmp.ne.s32.totalorder %s77, %s78
      %p92 = scmp.eq.s32.totalorder %s20, 1
      %p93 = por %p91, %p92
      %p95 = scmp.ne.s32.totalorder %s78, %s94
      %p96 = scmp.eq.s32.totalorder %s20, 0
      %p97 = por %p95, %p96
      %s99 = sadd.s32 %s98, 1
      %p102 = scmp.eq.s32.totalorder %s14, 1
      %p103 = scmp.ne.s32.totalorder %s98, %s100
      %p104 = scmp.eq.s32.totalorder %s14, 0
      %p105 = por %p103, %p104
      %p106 = scmp.ne.s32.totalorder %s98, %s100
      %p107 = scmp.eq.s32.totalorder %s19, 1
      %p108 = por %p106, %p107
      %p109 = scmp.ne.s32.totalorder %s100, %s101
      %p110 = scmp.eq.s32.totalorder %s19, 0
      %p111 = por %p109, %p110
      %p112 = scmp.ne.s32.totalorder %s100, %s101
      %p113 = scmp.eq.s32.totalorder %s20, 1
      %p114 = por %p112, %p113
      %p116 = scmp.ne.s32.totalorder %s101, %s115
      %p117 = scmp.eq.s32.totalorder %s20, 0
      %p118 = por %p116, %p117
      %s120 = sadd.s32 %s119, 1
      %p123 = scmp.eq.s32.totalorder %s14, 1
      %p124 = scmp.ne.s32.totalorder %s119, %s121
      %p125 = scmp.eq.s32.totalorder %s14, 0
      %p126 = por %p124, %p125
      %p127 = scmp.ne.s32.totalorder %s119, %s121
      %p128 = scmp.eq.s32.totalorder %s19, 1
      %p129 = por %p127, %p128
      %p130 = scmp.ne.s32.totalorder %s121, %s122
      %p131 = scmp.eq.s32.totalorder %s19, 0
      %p132 = por %p130, %p131
      %p133 = scmp.ne.s32.totalorder %s121, %s122
      %p134 = scmp.eq.s32.totalorder %s20, 1
      %p135 = por %p133, %p134
      %p137 = scmp.ne.s32.totalorder %s122, %s136
      %p138 = scmp.eq.s32.totalorder %s20, 0
      %p139 = por %p137, %p138
      %s141 = sadd.s32 %s140, 1
      %p144 = scmp.eq.s32.totalorder %s14, 1
      %p145 = scmp.ne.s32.totalorder %s140, %s142
      %p146 = scmp.eq.s32.totalorder %s14, 0
      %p147 = por %p145, %p146
      %p148 = scmp.ne.s32.totalorder %s140, %s142
      %p149 = scmp.eq.s32.totalorder %s19, 1
      %p150 = por %p148, %p149
      %p151 = scmp.ne.s32.totalorder %s142, %s143
      %p152 = scmp.eq.s32.totalorder %s19, 0
      %p153 = por %p151, %p152
      %p154 = scmp.ne.s32.totalorder %s142, %s143
      %p155 = scmp.eq.s32.totalorder %s20, 1
      %p156 = por %p154, %p155
      %p158 = scmp.ne.s32.totalorder %s143, %s157
      %p159 = scmp.eq.s32.totalorder %s20, 0
      %p160 = por %p158, %p159
      %s161 = ssub.s32 %s21, %s33
      %s162 = ssub.s32 %s22, %s29
      %s163 = sor.u32 %s161, %s162
      %p164 = scmp.eq.s32.totalorder %s163, 0
      %s166 = sadd.s32 %s165, 1
      %s167 = scalar_select %p164, %s165, %s166
      %p170 = pneg %p164
      %p171 = scmp.eq.s32.totalorder %s14, 1
      %p172 = por %p170, %p171
      %p173 = scmp.ne.s32.totalorder %s165, %s168
      %p174 = scmp.eq.s32.totalorder %s14, 0
      %p175 = por %p173, %p174
      %p176 = scmp.ne.s32.totalorder %s165, %s168
      %p177 = scmp.eq.s32.totalorder %s19, 1
      %p178 = por %p176, %p177
      %p179 = scmp.ne.s32.totalorder %s168, %s169
      %p180 = scmp.eq.s32.totalorder %s19, 0
      %p181 = por %p179, %p180
      %p182 = scmp.ne.s32.totalorder %s168, %s169
      %p183 = scmp.eq.s32.totalorder %s20, 1
      %p184 = por %p182, %p183
      %p186 = scmp.ne.s32.totalorder %s169, %s185
      %p187 = scmp.eq.s32.totalorder %s20, 0
      %p188 = por %p186, %p187
      %p189 = scmp.le.s32.totalorder 1, %s14
      %p190 = scmp.lt.s32.totalorder %s14, 3
      %p191 = pnand %p189, %p190
      %p192 = pneg %p191
      // Predicated region
      $region9: #{tpu_custom_call.1} parent=5 // pred_check
        _
      $region10: #{tpu_custom_call.1} parent=5 // pred_check_branch
        %194 = sbr.rel (%p191) target = $region12
      $region11: #{tpu_custom_call.1} parent=5 // pred_region
        %s195 = ssub.s32 %s14, 1
        // Predicated region
        $region13: #{tpu_custom_call.1} parent=11 // pred_check
          %p196 = pneg %p111
        $region14: #{tpu_custom_call.1} parent=11 // pred_check_branch
          %198 = sbr.rel (%p196) target = $region16
        $region15: #{tpu_custom_call.1} parent=11 // pred_region
          _
        $region16: #{tpu_custom_call.1} parent=11 // pred_fallthru
          _
        // Predicated region
        $region17: #{tpu_custom_call.1} parent=11 // pred_check
          %p199 = pneg %p132
        $region18: #{tpu_custom_call.1} parent=11 // pred_check_branch
          %201 = sbr.rel (%p199) target = $region20
        $region19: #{tpu_custom_call.1} parent=11 // pred_region
          _
        $region20: #{tpu_custom_call.1} parent=11 // pred_fallthru
          _
        // Predicated region
        $region21: #{tpu_custom_call.1} parent=11 // pred_check
          %p202 = pneg %p153
        $region22: #{tpu_custom_call.1} parent=11 // pred_check_branch
          %204 = sbr.rel (%p202) target = $region24
        $region23: #{tpu_custom_call.1} parent=11 // pred_region
          _
        $region24: #{tpu_custom_call.1} parent=11 // pred_fallthru
          _
      $region12: #{tpu_custom_call.1} parent=5 // pred_fallthru
        _
      %p205 = scmp.lt.s32.totalorder %s14, 2
      // Predicated region
      $region25: #{tpu_custom_call.1} parent=5 // pred_check
        %p206 = pneg %p205
      $region26: #{tpu_custom_call.1} parent=5 // pred_check_branch
        %208 = sbr.rel (%p206) target = $region28
      $region27: #{tpu_custom_call.1} parent=5 // pred_region
        // Predicated region
        $region29: #{tpu_custom_call.1} parent=27 // pred_check
          %p209 = pneg %p48
        $region30: #{tpu_custom_call.1} parent=27 // pred_check_branch
          %211 = sbr.rel (%p209) target = $region32
        $region31: #{tpu_custom_call.1} parent=27 // pred_region
          %s212 = smul.u32 2, %s22
          %p213 = scmp.lt.s32.totalorder %s21, 1
          %s214 = scalar_select %p213, %s21, 1
          %p215 = scmp.lt.s32.totalorder %s212, 1
          %s216 = scalar_select %p215, %s212, 1
          %s217 = smul.addr %s214, 8
          %s218 = sadd.s32 %s216, %s217
          %s219 = smul.addr %s218, 8
          %s220 = scalar_lea.vmem %s0, %s219
          %s221 = smul.u32 2, %s22
        $region32: #{tpu_custom_call.1} parent=27 // pred_fallthru
          _
        // Predicated region
        $region33: #{tpu_custom_call.1} parent=27 // pred_check
          %p222 = pneg %p84
        $region34: #{tpu_custom_call.1} parent=27 // pred_check_branch
          %224 = sbr.rel (%p222) target = $region36
        $region35: #{tpu_custom_call.1} parent=27 // pred_region
          %s225 = sand.u32 %s74, 1
          %s226 = sand.u32 %s74, 1
          %s227 = smul.addr %s226, 32
          %s228 = scalar_lea.vmem [#allocation2], %s227
          %s229 = smul.u32 %s22, 2
          %s230 = ssub.s32 %s229, 1
          %p231 = scmp.gt.s32.totalorder %s230, 0
          %s232 = scalar_select %p231, %s230, 0
          %s233 = smul.addr %s21, 8
          %s234 = sadd.s32 %s232, %s233
          %s235 = smul.addr %s234, 8
          %s236 = scalar_lea.vmem %s1, %s235
          // Predicated region
          $region37: #{tpu_custom_call.1} parent=35 // pred_check
            _
          $region38: #{tpu_custom_call.1} parent=35 // pred_check_branch
            %238 = sbr.rel (0) target = $region40
          $region39: #{tpu_custom_call.1} parent=35 // pred_region
            // Predicated region
            $region41: #{tpu_custom_call.1} parent=39 // pred_check
              _
            $region42: #{tpu_custom_call.1} parent=39 // pred_check_branch
              %240 = sbr.rel (0) target = $region44
            $region43: #{tpu_custom_call.1} parent=39 // pred_region
              // Predicated region
              $region56: #{tpu_custom_call.1} parent=43 // pred_check
                _
              $region57: #{tpu_custom_call.1} parent=43 // pred_check_branch
                %262 = sbr.rel (0) target = $region59
              $region58: #{tpu_custom_call.1} parent=43 // pred_region
                loop: start=0, step=1, limit=1
                $region60: #{tpu_custom_call.1} parent=58 // loop_pre_header
                  _
                $region61: #{tpu_custom_call.1} parent=58 // loop_header
                  %s264 = sphi 0, %s268
                  %p265 = scmp.ge.s32.totalorder %s264, 1
                  %s269 = sphi %s236, %s236
                  %s270 = sphi %s228, %s228
                $region62: #{tpu_custom_call.1} parent=58 // loop_header_branch
                  %267 = sbr.rel (%p265) target = $region66
                $region63: #{tpu_custom_call.1} parent=58 // loop_body
                  %v271 = vld [vmem:[%s269] sm:$0xff]
                  %272 = vst [vmem:[%s270] sm:$0xff] %v271
                  %v273 = vld [vmem:[%s269 + $0x10] sm:$0xff]
                  %274 = vst [vmem:[%s270 + $0x8] sm:$0xff] %v273
                  %v275 = vld [vmem:[%s269 + $0x20] sm:$0xff]
                  %276 = vst [vmem:[%s270 + $0x10] sm:$0xff] %v275
                  %v277 = vld [vmem:[%s269 + $0x30] sm:$0xff]
                  %278 = vst [vmem:[%s270 + $0x18] sm:$0xff] %v277
                $region64: #{tpu_custom_call.1} parent=58 // loop_footer
                  %s268 = sadd.s32 1, %s264
                $region65: #{tpu_custom_call.1} parent=58 // loop_footer_branch
                  %263 = sbr.rel target = $region61
                $region66: #{tpu_custom_call.1} parent=58 // loop_exit
                  _
              $region59: #{tpu_custom_call.1} parent=43 // pred_fallthru
                _
              // Predicated region
              $region67: #{tpu_custom_call.1} parent=43 // pred_check
                _
              $region68: #{tpu_custom_call.1} parent=43 // pred_check_branch
                %280 = sbr.rel target = $region70
              $region69: #{tpu_custom_call.1} parent=43 // pred_region
                _
              $region70: #{tpu_custom_call.1} parent=43 // pred_fallthru
                _
            $region44: #{tpu_custom_call.1} parent=39 // pred_fallthru
              _
            // Predicated region
            $region45: #{tpu_custom_call.1} parent=39 // pred_check
              _
            $region46: #{tpu_custom_call.1} parent=39 // pred_check_branch
              %242 = sbr.rel target = $region48
            $region47: #{tpu_custom_call.1} parent=39 // pred_region
              %s244 = ssub.s32 256, 1
              loop: start=0, step=1, limit=1
              $region49: #{tpu_custom_call.1} parent=47 // loop_pre_header
                _
              $region50: #{tpu_custom_call.1} parent=47 // loop_header
                %s246 = sphi 0, %s250
                %p247 = scmp.ge.s32.totalorder %s246, 1
                %s251 = sphi %s236, %s236
                %s252 = sphi %s228, %s228
              $region51: #{tpu_custom_call.1} parent=47 // loop_header_branch
                %249 = sbr.rel (%p247) target = $region55
              $region52: #{tpu_custom_call.1} parent=47 // loop_body
                %v253 = vld [vmem:[%s251] sm:%s244]
                %254 = vst [vmem:[%s252] sm:%s244] %v253
                %v255 = vld [vmem:[%s251 + $0x10] sm:%s244]
                %256 = vst [vmem:[%s252 + $0x8] sm:%s244] %v255
                %v257 = vld [vmem:[%s251 + $0x20] sm:%s244]
                %258 = vst [vmem:[%s252 + $0x10] sm:%s244] %v257
                %v259 = vld [vmem:[%s251 + $0x30] sm:%s244]
                %260 = vst [vmem:[%s252 + $0x18] sm:%s244] %v259
              $region53: #{tpu_custom_call.1} parent=47 // loop_footer
                %s250 = sadd.s32 1, %s246
              $region54: #{tpu_custom_call.1} parent=47 // loop_footer_branch
                %245 = sbr.rel target = $region50
              $region55: #{tpu_custom_call.1} parent=47 // loop_exit
                _
            $region48: #{tpu_custom_call.1} parent=39 // pred_fallthru
              _
          $region40: #{tpu_custom_call.1} parent=35 // pred_fallthru
            _
          %281 = vnop
        $region36: #{tpu_custom_call.1} parent=27 // pred_fallthru
          _
      $region28: #{tpu_custom_call.1} parent=5 // pred_fallthru
        _
      %p282 = scmp.le.s32.totalorder 1, %s14
      %p283 = scmp.lt.s32.totalorder %s14, 3
      %p284 = pnand %p282, %p283
      %p285 = pneg %p284
      // Predicated region
      $region71: #{tpu_custom_call.1} parent=5 // pred_check
        _
      $region72: #{tpu_custom_call.1} parent=5 // pred_check_branch
        %287 = sbr.rel (%p284) target = $region74
      $region73: #{tpu_custom_call.1} parent=5 // pred_region
        %s288 = ssub.s32 %s14, 1
        %s289 = sand.u32 %s77, 1
        %s290 = sand.u32 %s77, 1
        %s291 = smul.addr %s290, 32
        %s292 = scalar_lea.vmem [#allocation2], %s291
        // Predicated region
        $region75: #{tpu_custom_call.1} parent=73 // pred_check
          %p293 = pneg %p90
        $region76: #{tpu_custom_call.1} parent=73 // pred_check_branch
          %295 = sbr.rel (%p293) target = $region78
        $region77: #{tpu_custom_call.1} parent=73 // pred_region
          _
        $region78: #{tpu_custom_call.1} parent=73 // pred_fallthru
          _
        %s296 = smul.u32 2, %s24
        %p297 = scmp.lt.s32.totalorder %s23, 1
        %s298 = scalar_select %p297, %s23, 1
        %p299 = scmp.lt.s32.totalorder %s296, 1
        %s300 = scalar_select %p299, %s296, 1
        %s301 = smul.addr %s298, 8
        %s302 = sadd.s32 %s300, %s301
        %s303 = smul.addr %s302, 8
        %s304 = scalar_lea.vmem %s0, %s303
        %p305 = pneg %p54
        %p306 = pneg %p51
        %s307 = sand.u32 %s77, 1
        %s308 = sand.u32 %s77, 1
        %s309 = smul.addr %s308, 32
        %s310 = scalar_lea.vmem [#allocation2], %s309
        %p311 = pneg %p90
        %p312 = pneg %p87
        %p313 = pneg %p111
        %p314 = pneg %p108
        %p315 = pneg %p132
        %p316 = pneg %p129
        %p317 = pneg %p153
        %p318 = pneg %p150
        %p319 = pneg %p181
        %p320 = pneg %p178
        %s321 = sand.u32 %s168, 1
        %s322 = scalar_lea.sflag [#allocation4], %s321
        %s323 = sand.u32 %s168, 1
        %s324 = smul.addr %s323, 16
        %s325 = scalar_lea.vmem [#allocation3], %s324
        %s326 = smul.u32 2, %s24
        %p327 = scmp.lt.s32.totalorder %s23, 1
        %s328 = scalar_select %p327, %s23, 1
        %p329 = scmp.lt.s32.totalorder %s326, 1
        %s330 = scalar_select %p329, %s326, 1
        %s331 = smul.addr %s328, 8
        %s332 = sadd.s32 %s330, %s331
        %s333 = smul.addr %s332, 8
        %s334 = scalar_lea.vmem %s0, %s333
        %s335 = smul.u32 2, %s24
        %s336 = smul.u32 %s24, 2
        %s337 = ssub.s32 %s336, 1
        %p338 = scmp.gt.s32.totalorder %s337, 0
        %s339 = scalar_select %p338, %s337, 0
        %s340 = smul.u32 2, %s24
        %v341 = vld [vmem:[%s292] sm:$0xff]
        %v342 = vld [vmem:[%s292 + $0x8] sm:$0xff]
        %v343 = vld [vmem:[%s292 + $0x10] sm:$0xff]
        %v344 = vld [vmem:[%s292 + $0x18] sm:$0xff]
        %v345 = vld [vmem:[%s334] sm:$0xff]
        %v346 = vld [vmem:[%s334 + $0x8] sm:$0xff]
        %v347 = vld [vmem:[%s334 + $0x10] sm:$0xff]
        %v348 = vld [vmem:[%s334 + $0x18] sm:$0xff]
        %v349 = vld [vmem:[%s334 + $0x20] sm:$0xff]
        %v350 = vld [vmem:[%s334 + $0x28] sm:$0xff]
        %v351 = vld [vmem:[%s334 + $0x30] sm:$0xff]
        %v352 = vld [vmem:[%s334 + $0x38] sm:$0xff]
        %v353 = vld [vmem:[%s2] sm:$0xff]
        %vm354 = vcmask 64512
        %v356 = vsel %vm354, %v341, 0
        %v359 = vsel %vm354, %v345, 0
        %v362 = vsel %vm354, %v346, 0
        %v365 = vsel %vm354, %v342, 0
        %v368 = vsel %vm354, %v347, 0
        %v371 = vsel %vm354, %v348, 0
        %v374 = vsel %vm354, %v343, 0
        %v377 = vsel %vm354, %v349, 0
        %v380 = vsel %vm354, %v350, 0
        %v383 = vsel %vm354, %v344, 0
        %v386 = vsel %vm354, %v351, 0
        %v389 = vsel %vm354, %v352, 0
        %391 = vmatpush.msra.mxu0 0.0
        %392 = vmatpush.msra.mxu0 0.0
        %393 = vmatpush.msra.mxu0 0.0
        %394 = vmatpush.msra.mxu0 0.0
        %395 = vmatpush.msra.mxu0 0.0
        %396 = vmatpush.msra.mxu0 0.0
        %397 = vmatpush.msra.mxu0 0.0
        %398 = vmatpush.msra.mxu0 0.0
        %399 = vmatpush.msra.mxu0 0.0
        %400 = vmatpush.msra.mxu0 0.0
        %401 = vmatpush.msra.mxu0 0.0
        %402 = vmatpush.msra.mxu0 0.0
        %403 = vmatpush.msra.mxu0 0.0
        %404 = vmatpush.msra.mxu0 0.0
        %405 = vmatpush.msra.mxu0 0.0
        %406 = vmatpush.msra.mxu0 %v353
        %407 = vmatmul.f32.gmra.mxu0 %v356
        %v408 = vpop.f32.mrf.mxu0
        %v409 = vadd.f32 0.0, %v408
        %410 = vmatmul.f32.gmra.mxu0 %v359
        %v411 = vpop.f32.mrf.mxu0
        %v412 = vadd.f32 0.0, %v411
        %413 = vmatmul.f32.gmra.mxu0 %v362
        %v414 = vpop.f32.mrf.mxu0
        %v415 = vadd.f32 0.0, %v414
        %416 = vmatmul.f32.gmra.mxu0 %v365
        %v417 = vpop.f32.mrf.mxu0
        %v418 = vadd.f32 0.0, %v417
        %419 = vmatmul.f32.gmra.mxu0 %v368
        %v420 = vpop.f32.mrf.mxu0
        %v421 = vadd.f32 0.0, %v420
        %422 = vmatmul.f32.gmra.mxu0 %v371
        %v423 = vpop.f32.mrf.mxu0
        %v424 = vadd.f32 0.0, %v423
        %425 = vmatmul.f32.gmra.mxu0 %v374
        %v426 = vpop.f32.mrf.mxu0
        %v427 = vadd.f32 0.0, %v426
        %428 = vmatmul.f32.gmra.mxu0 %v377
        %v429 = vpop.f32.mrf.mxu0
        %v430 = vadd.f32 0.0, %v429
        %431 = vmatmul.f32.gmra.mxu0 %v380
        %v432 = vpop.f32.mrf.mxu0
        %v433 = vadd.f32 0.0, %v432
        %434 = vmatmul.f32.gmra.mxu0 %v383
        %v435 = vpop.f32.mrf.mxu0
        %v436 = vadd.f32 0.0, %v435
        %437 = vmatmul.f32.gmra.mxu0 %v386
        %v438 = vpop.f32.mrf.mxu0
        %v439 = vadd.f32 0.0, %v438
        %440 = vmatmul.f32.gmra.mxu0 %v389
        %v441 = vpop.f32.mrf.mxu0
        %v442 = vadd.f32 0.0, %v441
        %443 = vdwg.mxu0
        %v444 = vlaneseq
        %v445 = vshrl.u32 %v444, 7
        %v446 = vadd.s32 %v445, 8
        %v447 = vlaneseq
        %v448 = vand.u32 %v447, 127
        %v449 = vsub.s32 %v448, 8
        %v450 = vsub.s32 %v449, %v445
        %v451 = vsub.s32 %v449, %v446
        %vm452 = vcmp.le.s32.totalorder %v450, 0
        %vm453 = vcmp.le.s32.totalorder %v451, 0
        %vm454 = vcmp.gt.s32.totalorder %v450, 4294967288
        %vm455 = vcmp.gt.s32.totalorder %v451, 4294967288
        %vm456 = vmand %vm452, %vm454
        %vm457 = vmand %vm453, %vm455
        %s458 = smul.u32 %s24, 16
        %v459 = vstv %s458
        %v460 = vadd.s32 %v459, %v448
        %v461 = vsub.s32 %v460, 8
        %vm462 = vcmp.lt.s32.totalorder %v461, 0
        %466 = vrot.lane.b32.xlu0 %v409, 120
        %v467 = vpop.permute.xlu0 %466
        %468 = vrot.lane.b32.xlu0 %v412, 120
        %v469 = vpop.permute.xlu0 %468
        %470 = vrot.lane.b32.xlu0 %v415, 120
        %v471 = vpop.permute.xlu0 %470
        %v472 = vsel %vm354, %v412, 0
        %v474 = vsel %vm354, %v415, 0
        %v476 = vsel %vm354, %v467, 0
        %v478 = vsel %vm354, %v469, 0
        %v480 = vsel %vm354, %v471, 0
        %482 = vmatpush.xpose.msra.mxu0 0.0
        %483 = vmatpush.xpose.msra.mxu0 0.0
        %484 = vmatpush.xpose.msra.mxu0 0.0
        %485 = vmatpush.xpose.msra.mxu0 0.0
        %486 = vmatpush.xpose.msra.mxu0 0.0
        %487 = vmatpush.xpose.msra.mxu0 0.0
        %488 = vmatpush.xpose.msra.mxu0 0.0
        %489 = vmatpush.xpose.msra.mxu0 0.0
        %490 = vmatpush.xpose.msra.mxu0 0.0
        %491 = vmatpush.xpose.msra.mxu0 0.0
        %492 = vmatpush.xpose.msra.mxu0 0.0
        %493 = vmatpush.xpose.msra.mxu0 0.0
        %494 = vmatpush.xpose.msra.mxu0 0.0
        %495 = vmatpush.xpose.msra.mxu0 %v480
        %496 = vmatpush.xpose.msra.mxu0 %v478
        %497 = vmatpush.xpose.msra.mxu0 %v476
        %498 = vmatmul.f32.gmra.mxu0 %v472
        %v499 = vpop.f32.mrf.mxu0
        %v500 = vadd.f32 0.0, %v499
        %501 = vmatmul.f32.gmra.mxu0 %v474
        %v502 = vpop.f32.mrf.mxu0
        %v503 = vadd.f32 0.0, %v502
        %504 = vdwg.mxu0
        %v505 = vsel %vm462, 0.0, %v500
        %v506 = vsel %vm462, 0.0, %v503
        %v507 = vsel %vm456, %v505, -1e+30
        %v508 = vsel %vm457, %v506, -1e+30
        %vm509 = vcmask 195584
        %v510 = vsel %vm509, %v507, -inf
        %511 = vmax.xlane.f32.xlu0 %v510
        %v512 = vpop.xlane.xlu0 %511
        %v513 = vsel %vm509, %v508, -inf
        %514 = vmax.xlane.f32.xlu0 %v513
        %v515 = vpop.xlane.xlu0 %514
        %v516 = vsub.f32 %v507, %v512
        %v517 = vsub.f32 %v508, %v515
        %v518 = vmul.f32 %v516, 1.442695
        %v519 = vpow.pop %v518
        %v520 = vmul.f32 %v517, 1.442695
        %v521 = vpow.pop %v520
        %v522 = vsel %vm456, %v519, 0.0
        %v523 = vsel %vm457, %v521, 0.0
        %v524 = vsel %vm509, %v522, 0.0
        %525 = vadd.xlane.f32.xlu0 %v524
        %v526 = vpop.xlane.xlu0 %525
        %v527 = vsel %vm509, %v523, 0.0
        %528 = vadd.xlane.f32.xlu0 %v527
        %v529 = vpop.xlane.xlu0 %528
        %v530 = vsel %vm462, 0.0, %v522
        %v531 = vsel %vm462, 0.0, %v523
        %v532 = vrcp.pop %v526
        %v533 = vmul.f32 %v526, %v532
        %v534 = vsub.f32 1.0, %v533
        %v535 = vmul.f32 %v532, %v534
        %v536 = vadd.f32 %v532, %v535
        %vm537 = vweird.f32 %v526
        %vm538 = vweird.f32 %v532
        %vm539 = vmor %vm537, %vm538
        %v540 = vsel %vm539, %v532, %v536
        %v541 = vand.u32 2147483647, %v526
        %vm542 = vcmp.eq.f32.partialorder %v541, 8.507059e+37
        %v543 = vand.u32 %v526, 2147483648
        %v544 = vor.u32 1.1754944e-38, %v543
        %v545 = vsel %vm542, %v544, %v540
        %v546 = vmul.f32 1.0, %v545
        %v547 = vrcp.pop %v529
        %v548 = vmul.f32 %v529, %v547
        %v549 = vsub.f32 1.0, %v548
        %v550 = vmul.f32 %v547, %v549
        %v551 = vadd.f32 %v547, %v550
        %vm552 = vweird.f32 %v529
        %vm553 = vweird.f32 %v547
        %vm554 = vmor %vm552, %vm553
        %v555 = vsel %vm554, %v547, %v551
        %v556 = vand.u32 2147483647, %v529
        %vm557 = vcmp.eq.f32.partialorder %v556, 8.507059e+37
        %v558 = vand.u32 %v529, 2147483648
        %v559 = vor.u32 1.1754944e-38, %v558
        %v560 = vsel %vm557, %v559, %v555
        %v561 = vmul.f32 1.0, %v560
        %v562 = vmul.f32 %v530, %v546
        %v563 = vmul.f32 %v531, %v561
        %564 = vrot.lane.b32.xlu0 %v409, 112
        %v565 = vpop.permute.xlu0 %564
        %566 = vrot.lane.b32.xlu0 %v412, 112
        %v567 = vpop.permute.xlu0 %566
        %568 = vrot.lane.b32.xlu0 %v415, 112
        %v569 = vpop.permute.xlu0 %568
        %v574 = vsel %vm509, %v562, 0
        %v577 = vsel %vm509, %v563, 0
        %579 = vmatpush.msra.mxu0 0.0
        %580 = vmatpush.msra.mxu0 0.0
        %581 = vmatpush.msra.mxu0 0.0
        %582 = vmatpush.msra.mxu0 0.0
        %583 = vmatpush.msra.mxu0 0.0
        %584 = vmatpush.msra.mxu0 0.0
        %585 = vmatpush.msra.mxu0 0.0
        %586 = vmatpush.msra.mxu0 0.0
        %587 = vmatpush.msra.mxu0 0.0
        %588 = vmatpush.msra.mxu0 0.0
        %589 = vmatpush.msra.mxu0 0.0
        %590 = vmatpush.msra.mxu0 0.0
        %591 = vmatpush.msra.mxu0 0.0
        %592 = vmatpush.msra.mxu0 %v569
        %593 = vmatpush.msra.mxu0 %v567
        %594 = vmatpush.msra.mxu0 %v565
        %595 = vmatmul.f32.gmra.mxu0 %v574
        %v596 = vpop.f32.mrf.mxu0
        %v597 = vadd.f32 0.0, %v596
        %598 = vmatmul.f32.gmra.mxu0 %v577
        %v599 = vpop.f32.mrf.mxu0
        %v600 = vadd.f32 0.0, %v599
        %601 = vdwg.mxu0
        %v602 = vld [vmem:[%s3] sm:$0xff]
        %606 = vrot.lane.b32.xlu0 %v418, 120
        %v607 = vpop.permute.xlu0 %606
        %608 = vrot.lane.b32.xlu0 %v421, 120
        %v609 = vpop.permute.xlu0 %608
        %610 = vrot.lane.b32.xlu0 %v424, 120
        %v611 = vpop.permute.xlu0 %610
        %v612 = vsel %vm354, %v421, 0
        %v614 = vsel %vm354, %v424, 0
        %v616 = vsel %vm354, %v607, 0
        %v618 = vsel %vm354, %v609, 0
        %v620 = vsel %vm354, %v611, 0
        %622 = vmatpush.xpose.msra.mxu0 0.0
        %623 = vmatpush.xpose.msra.mxu0 0.0
        %624 = vmatpush.xpose.msra.mxu0 0.0
        %625 = vmatpush.xpose.msra.mxu0 0.0
        %626 = vmatpush.xpose.msra.mxu0 0.0
        %627 = vmatpush.xpose.msra.mxu0 0.0
        %628 = vmatpush.xpose.msra.mxu0 0.0
        %629 = vmatpush.xpose.msra.mxu0 0.0
        %630 = vmatpush.xpose.msra.mxu0 0.0
        %631 = vmatpush.xpose.msra.mxu0 0.0
        %632 = vmatpush.xpose.msra.mxu0 0.0
        %633 = vmatpush.xpose.msra.mxu0 0.0
        %634 = vmatpush.xpose.msra.mxu0 0.0
        %635 = vmatpush.xpose.msra.mxu0 %v620
        %636 = vmatpush.xpose.msra.mxu0 %v618
        %637 = vmatpush.xpose.msra.mxu0 %v616
        %638 = vmatmul.f32.gmra.mxu0 %v612
        %v639 = vpop.f32.mrf.mxu0
        %v640 = vadd.f32 0.0, %v639
        %641 = vmatmul.f32.gmra.mxu0 %v614
        %v642 = vpop.f32.mrf.mxu0
        %v643 = vadd.f32 0.0, %v642
        %644 = vdwg.mxu0
        %v645 = vsel %vm462, 0.0, %v640
        %v646 = vsel %vm462, 0.0, %v643
        %v647 = vsel %vm456, %v645, -1e+30
        %v648 = vsel %vm457, %v646, -1e+30
        %v649 = vsel %vm509, %v647, -inf
        %650 = vmax.xlane.f32.xlu0 %v649
        %v651 = vpop.xlane.xlu0 %650
        %v652 = vsel %vm509, %v648, -inf
        %653 = vmax.xlane.f32.xlu0 %v652
        %v654 = vpop.xlane.xlu0 %653
        %v655 = vsub.f32 %v647, %v651
        %v656 = vsub.f32 %v648, %v654
        %v657 = vmul.f32 %v655, 1.442695
        %v658 = vpow.pop %v657
        %v659 = vmul.f32 %v656, 1.442695
        %v660 = vpow.pop %v659
        %v661 = vsel %vm456, %v658, 0.0
        %v662 = vsel %vm457, %v660, 0.0
        %v663 = vsel %vm509, %v661, 0.0
        %664 = vadd.xlane.f32.xlu0 %v663
        %v665 = vpop.xlane.xlu0 %664
        %v666 = vsel %vm509, %v662, 0.0
        %667 = vadd.xlane.f32.xlu0 %v666
        %v668 = vpop.xlane.xlu0 %667
        %v669 = vsel %vm462, 0.0, %v661
        %v670 = vsel %vm462, 0.0, %v662
        %v671 = vrcp.pop %v665
        %v672 = vmul.f32 %v665, %v671
        %v673 = vsub.f32 1.0, %v672
        %v674 = vmul.f32 %v671, %v673
        %v675 = vadd.f32 %v671, %v674
        %vm676 = vweird.f32 %v665
        %vm677 = vweird.f32 %v671
        %vm678 = vmor %vm676, %vm677
        %v679 = vsel %vm678, %v671, %v675
        %v680 = vand.u32 2147483647, %v665
        %vm681 = vcmp.eq.f32.partialorder %v680, 8.507059e+37
        %v682 = vand.u32 %v665, 2147483648
        %v683 = vor.u32 1.1754944e-38, %v682
        %v684 = vsel %vm681, %v683, %v679
        %v685 = vmul.f32 1.0, %v684
        %v686 = vrcp.pop %v668
        %v687 = vmul.f32 %v668, %v686
        %v688 = vsub.f32 1.0, %v687
        %v689 = vmul.f32 %v686, %v688
        %v690 = vadd.f32 %v686, %v689
        %vm691 = vweird.f32 %v668
        %vm692 = vweird.f32 %v686
        %vm693 = vmor %vm691, %vm692
        %v694 = vsel %vm693, %v686, %v690
        %v695 = vand.u32 2147483647, %v668
        %vm696 = vcmp.eq.f32.partialorder %v695, 8.507059e+37
        %v697 = vand.u32 %v668, 2147483648
        %v698 = vor.u32 1.1754944e-38, %v697
        %v699 = vsel %vm696, %v698, %v694
        %v700 = vmul.f32 1.0, %v699
        %v701 = vmul.f32 %v669, %v685
        %v702 = vmul.f32 %v670, %v700
        %703 = vrot.lane.b32.xlu0 %v418, 112
        %v704 = vpop.permute.xlu0 %703
        %705 = vrot.lane.b32.xlu0 %v421, 112
        %v706 = vpop.permute.xlu0 %705
        %707 = vrot.lane.b32.xlu0 %v424, 112
        %v708 = vpop.permute.xlu0 %707
        %v713 = vsel %vm509, %v701, 0
        %v716 = vsel %vm509, %v702, 0
        %718 = vmatpush.msra.mxu0 0.0
        %719 = vmatpush.msra.mxu0 0.0
        %720 = vmatpush.msra.mxu0 0.0
        %721 = vmatpush.msra.mxu0 0.0
        %722 = vmatpush.msra.mxu0 0.0
        %723 = vmatpush.msra.mxu0 0.0
        %724 = vmatpush.msra.mxu0 0.0
        %725 = vmatpush.msra.mxu0 0.0
        %726 = vmatpush.msra.mxu0 0.0
        %727 = vmatpush.msra.mxu0 0.0
        %728 = vmatpush.msra.mxu0 0.0
        %729 = vmatpush.msra.mxu0 0.0
        %730 = vmatpush.msra.mxu0 0.0
        %731 = vmatpush.msra.mxu0 %v708
        %732 = vmatpush.msra.mxu0 %v706
        %733 = vmatpush.msra.mxu0 %v704
        %734 = vmatmul.f32.gmra.mxu0 %v713
        %v735 = vpop.f32.mrf.mxu0
        %v736 = vadd.f32 0.0, %v735
        %737 = vmatmul.f32.gmra.mxu0 %v716
        %v738 = vpop.f32.mrf.mxu0
        %v739 = vadd.f32 0.0, %v738
        %740 = vdwg.mxu0
        %s741 = scalar_lea.vmem %s3, 8
        %v742 = vld [vmem:[%s741] sm:$0xff]
        %v744 = vsel %vm354, %v736, 0
        %v747 = vsel %vm354, %v739, 0
        %749 = vmatpush.msra.mxu0 0.0
        %750 = vmatpush.msra.mxu0 0.0
        %751 = vmatpush.msra.mxu0 0.0
        %752 = vmatpush.msra.mxu0 0.0
        %753 = vmatpush.msra.mxu0 0.0
        %754 = vmatpush.msra.mxu0 0.0
        %755 = vmatpush.msra.mxu0 0.0
        %756 = vmatpush.msra.mxu0 0.0
        %757 = vmatpush.msra.mxu0 0.0
        %758 = vmatpush.msra.mxu0 0.0
        %759 = vmatpush.msra.mxu0 0.0
        %760 = vmatpush.msra.mxu0 0.0
        %761 = vmatpush.msra.mxu0 0.0
        %762 = vmatpush.msra.mxu0 0.0
        %763 = vmatpush.msra.mxu0 0.0
        %764 = vmatpush.msra.mxu0 %v742
        %765 = vmatmul.f32.gmra.mxu0 %v744
        %v766 = vpop.f32.mrf.mxu0
        %v767 = vadd.f32 0.0, %v766
        %768 = vmatmul.f32.gmra.mxu0 %v747
        %v769 = vpop.f32.mrf.mxu0
        %v770 = vadd.f32 0.0, %v769
        %771 = vdwg.mxu0
        %v773 = vsel %vm354, %v597, 0
        %v776 = vsel %vm354, %v600, 0
        %778 = vmatpush.msra.mxu0 0.0
        %779 = vmatpush.msra.mxu0 0.0
        %780 = vmatpush.msra.mxu0 0.0
        %781 = vmatpush.msra.mxu0 0.0
        %782 = vmatpush.msra.mxu0 0.0
        %783 = vmatpush.msra.mxu0 0.0
        %784 = vmatpush.msra.mxu0 0.0
        %785 = vmatpush.msra.mxu0 0.0
        %786 = vmatpush.msra.mxu0 0.0
        %787 = vmatpush.msra.mxu0 0.0
        %788 = vmatpush.msra.mxu0 0.0
        %789 = vmatpush.msra.mxu0 0.0
        %790 = vmatpush.msra.mxu0 0.0
        %791 = vmatpush.msra.mxu0 0.0
        %792 = vmatpush.msra.mxu0 0.0
        %793 = vmatpush.msra.mxu0 %v602
        %794 = vmatmul.f32.gmra.mxu0 %v773
        %v795 = vpop.f32.mrf.mxu0
        %v796 = vadd.f32 %v767, %v795
        %797 = vmatmul.f32.gmra.mxu0 %v776
        %v798 = vpop.f32.mrf.mxu0
        %v799 = vadd.f32 %v770, %v798
        %800 = vdwg.mxu0
        %804 = vrot.lane.b32.xlu0 %v427, 120
        %v805 = vpop.permute.xlu0 %804
        %806 = vrot.lane.b32.xlu0 %v430, 120
        %v807 = vpop.permute.xlu0 %806
        %808 = vrot.lane.b32.xlu0 %v433, 120
        %v809 = vpop.permute.xlu0 %808
        %v810 = vsel %vm354, %v430, 0
        %v812 = vsel %vm354, %v433, 0
        %v814 = vsel %vm354, %v805, 0
        %v816 = vsel %vm354, %v807, 0
        %v818 = vsel %vm354, %v809, 0
        %820 = vmatpush.xpose.msra.mxu0 0.0
        %821 = vmatpush.xpose.msra.mxu0 0.0
        %822 = vmatpush.xpose.msra.mxu0 0.0
        %823 = vmatpush.xpose.msra.mxu0 0.0
        %824 = vmatpush.xpose.msra.mxu0 0.0
        %825 = vmatpush.xpose.msra.mxu0 0.0
        %826 = vmatpush.xpose.msra.mxu0 0.0
        %827 = vmatpush.xpose.msra.mxu0 0.0
        %828 = vmatpush.xpose.msra.mxu0 0.0
        %829 = vmatpush.xpose.msra.mxu0 0.0
        %830 = vmatpush.xpose.msra.mxu0 0.0
        %831 = vmatpush.xpose.msra.mxu0 0.0
        %832 = vmatpush.xpose.msra.mxu0 0.0
        %833 = vmatpush.xpose.msra.mxu0 %v818
        %834 = vmatpush.xpose.msra.mxu0 %v816
        %835 = vmatpush.xpose.msra.mxu0 %v814
        %836 = vmatmul.f32.gmra.mxu0 %v810
        %v837 = vpop.f32.mrf.mxu0
        %v838 = vadd.f32 0.0, %v837
        %839 = vmatmul.f32.gmra.mxu0 %v812
        %v840 = vpop.f32.mrf.mxu0
        %v841 = vadd.f32 0.0, %v840
        %842 = vdwg.mxu0
        %v843 = vsel %vm462, 0.0, %v838
        %v844 = vsel %vm462, 0.0, %v841
        %v845 = vsel %vm456, %v843, -1e+30
        %v846 = vsel %vm457, %v844, -1e+30
        %v847 = vsel %vm509, %v845, -inf
        %848 = vmax.xlane.f32.xlu0 %v847
        %v849 = vpop.xlane.xlu0 %848
        %v850 = vsel %vm509, %v846, -inf
        %851 = vmax.xlane.f32.xlu0 %v850
        %v852 = vpop.xlane.xlu0 %851
        %v853 = vsub.f32 %v845, %v849
        %v854 = vsub.f32 %v846, %v852
        %v855 = vmul.f32 %v853, 1.442695
        %v856 = vpow.pop %v855
        %v857 = vmul.f32 %v854, 1.442695
        %v858 = vpow.pop %v857
        %v859 = vsel %vm456, %v856, 0.0
        %v860 = vsel %vm457, %v858, 0.0
        %v861 = vsel %vm509, %v859, 0.0
        %862 = vadd.xlane.f32.xlu0 %v861
        %v863 = vpop.xlane.xlu0 %862
        %v864 = vsel %vm509, %v860, 0.0
        %865 = vadd.xlane.f32.xlu0 %v864
        %v866 = vpop.xlane.xlu0 %865
        %v867 = vsel %vm462, 0.0, %v859
        %v868 = vsel %vm462, 0.0, %v860
        %v869 = vrcp.pop %v863
        %v870 = vmul.f32 %v863, %v869
        %v871 = vsub.f32 1.0, %v870
        %v872 = vmul.f32 %v869, %v871
        %v873 = vadd.f32 %v869, %v872
        %vm874 = vweird.f32 %v863
        %vm875 = vweird.f32 %v869
        %vm876 = vmor %vm874, %vm875
        %v877 = vsel %vm876, %v869, %v873
        %v878 = vand.u32 2147483647, %v863
        %vm879 = vcmp.eq.f32.partialorder %v878, 8.507059e+37
        %v880 = vand.u32 %v863, 2147483648
        %v881 = vor.u32 1.1754944e-38, %v880
        %v882 = vsel %vm879, %v881, %v877
        %v883 = vmul.f32 1.0, %v882
        %v884 = vrcp.pop %v866
        %v885 = vmul.f32 %v866, %v884
        %v886 = vsub.f32 1.0, %v885
        %v887 = vmul.f32 %v884, %v886
        %v888 = vadd.f32 %v884, %v887
        %vm889 = vweird.f32 %v866
        %vm890 = vweird.f32 %v884
        %vm891 = vmor %vm889, %vm890
        %v892 = vsel %vm891, %v884, %v888
        %v893 = vand.u32 2147483647, %v866
        %vm894 = vcmp.eq.f32.partialorder %v893, 8.507059e+37
        %v895 = vand.u32 %v866, 2147483648
        %v896 = vor.u32 1.1754944e-38, %v895
        %v897 = vsel %vm894, %v896, %v892
        %v898 = vmul.f32 1.0, %v897
        %v899 = vmul.f32 %v867, %v883
        %v900 = vmul.f32 %v868, %v898
        %901 = vrot.lane.b32.xlu0 %v427, 112
        %v902 = vpop.permute.xlu0 %901
        %903 = vrot.lane.b32.xlu0 %v430, 112
        %v904 = vpop.permute.xlu0 %903
        %905 = vrot.lane.b32.xlu0 %v433, 112
        %v906 = vpop.permute.xlu0 %905
        %v911 = vsel %vm509, %v899, 0
        %v914 = vsel %vm509, %v900, 0
        %916 = vmatpush.msra.mxu0 0.0
        %917 = vmatpush.msra.mxu0 0.0
        %918 = vmatpush.msra.mxu0 0.0
        %919 = vmatpush.msra.mxu0 0.0
        %920 = vmatpush.msra.mxu0 0.0
        %921 = vmatpush.msra.mxu0 0.0
        %922 = vmatpush.msra.mxu0 0.0
        %923 = vmatpush.msra.mxu0 0.0
        %924 = vmatpush.msra.mxu0 0.0
        %925 = vmatpush.msra.mxu0 0.0
        %926 = vmatpush.msra.mxu0 0.0
        %927 = vmatpush.msra.mxu0 0.0
        %928 = vmatpush.msra.mxu0 0.0
        %929 = vmatpush.msra.mxu0 %v906
        %930 = vmatpush.msra.mxu0 %v904
        %931 = vmatpush.msra.mxu0 %v902
        %932 = vmatmul.f32.gmra.mxu0 %v911
        %v933 = vpop.f32.mrf.mxu0
        %v934 = vadd.f32 0.0, %v933
        %935 = vmatmul.f32.gmra.mxu0 %v914
        %v936 = vpop.f32.mrf.mxu0
        %v937 = vadd.f32 0.0, %v936
        %938 = vdwg.mxu0
        %s939 = scalar_lea.vmem %s3, 16
        %v940 = vld [vmem:[%s939] sm:$0xff]
        %v942 = vsel %vm354, %v934, 0
        %v945 = vsel %vm354, %v937, 0
        %947 = vmatpush.msra.mxu0 0.0
        %948 = vmatpush.msra.mxu0 0.0
        %949 = vmatpush.msra.mxu0 0.0
        %950 = vmatpush.msra.mxu0 0.0
        %951 = vmatpush.msra.mxu0 0.0
        %952 = vmatpush.msra.mxu0 0.0
        %953 = vmatpush.msra.mxu0 0.0
        %954 = vmatpush.msra.mxu0 0.0
        %955 = vmatpush.msra.mxu0 0.0
        %956 = vmatpush.msra.mxu0 0.0
        %957 = vmatpush.msra.mxu0 0.0
        %958 = vmatpush.msra.mxu0 0.0
        %959 = vmatpush.msra.mxu0 0.0
        %960 = vmatpush.msra.mxu0 0.0
        %961 = vmatpush.msra.mxu0 0.0
        %962 = vmatpush.msra.mxu0 %v940
        %963 = vmatmul.f32.gmra.mxu0 %v942
        %v964 = vpop.f32.mrf.mxu0
        %v965 = vadd.f32 0.0, %v964
        %966 = vmatmul.f32.gmra.mxu0 %v945
        %v967 = vpop.f32.mrf.mxu0
        %v968 = vadd.f32 0.0, %v967
        %969 = vdwg.mxu0
        %v970 = vadd.f32 %v796, %v965
        %v971 = vadd.f32 %v799, %v968
        %975 = vrot.lane.b32.xlu0 %v436, 120
        %v976 = vpop.permute.xlu0 %975
        %977 = vrot.lane.b32.xlu0 %v439, 120
        %v978 = vpop.permute.xlu0 %977
        %979 = vrot.lane.b32.xlu0 %v442, 120
        %v980 = vpop.permute.xlu0 %979
        %v981 = vsel %vm354, %v439, 0
        %v983 = vsel %vm354, %v442, 0
        %v985 = vsel %vm354, %v976, 0
        %v987 = vsel %vm354, %v978, 0
        %v989 = vsel %vm354, %v980, 0
        %991 = vmatpush.xpose.msra.mxu0 0.0
        %992 = vmatpush.xpose.msra.mxu0 0.0
        %993 = vmatpush.xpose.msra.mxu0 0.0
        %994 = vmatpush.xpose.msra.mxu0 0.0
        %995 = vmatpush.xpose.msra.mxu0 0.0
        %996 = vmatpush.xpose.msra.mxu0 0.0
        %997 = vmatpush.xpose.msra.mxu0 0.0
        %998 = vmatpush.xpose.msra.mxu0 0.0
        %999 = vmatpush.xpose.msra.mxu0 0.0
        %1000 = vmatpush.xpose.msra.mxu0 0.0
        %1001 = vmatpush.xpose.msra.mxu0 0.0
        %1002 = vmatpush.xpose.msra.mxu0 0.0
        %1003 = vmatpush.xpose.msra.mxu0 0.0
        %1004 = vmatpush.xpose.msra.mxu0 %v989
        %1005 = vmatpush.xpose.msra.mxu0 %v987
        %1006 = vmatpush.xpose.msra.mxu0 %v985
        %1007 = vmatmul.f32.gmra.mxu0 %v981
        %v1008 = vpop.f32.mrf.mxu0
        %v1009 = vadd.f32 0.0, %v1008
        %1010 = vmatmul.f32.gmra.mxu0 %v983
        %v1011 = vpop.f32.mrf.mxu0
        %v1012 = vadd.f32 0.0, %v1011
        %1013 = vdwg.mxu0
        %v1014 = vsel %vm462, 0.0, %v1009
        %v1015 = vsel %vm462, 0.0, %v1012
        %v1016 = vsel %vm456, %v1014, -1e+30
        %v1017 = vsel %vm457, %v1015, -1e+30
        %v1018 = vsel %vm509, %v1016, -inf
        %1019 = vmax.xlane.f32.xlu0 %v1018
        %v1020 = vpop.xlane.xlu0 %1019
        %v1021 = vsel %vm509, %v1017, -inf
        %1022 = vmax.xlane.f32.xlu0 %v1021
        %v1023 = vpop.xlane.xlu0 %1022
        %v1024 = vsub.f32 %v1016, %v1020
        %v1025 = vsub.f32 %v1017, %v1023
        %v1026 = vmul.f32 %v1024, 1.442695
        %v1027 = vpow.pop %v1026
        %v1028 = vmul.f32 %v1025, 1.442695
        %v1029 = vpow.pop %v1028
        %v1030 = vsel %vm456, %v1027, 0.0
        %v1031 = vsel %vm457, %v1029, 0.0
        %v1032 = vsel %vm509, %v1030, 0.0
        %1033 = vadd.xlane.f32.xlu0 %v1032
        %v1034 = vpop.xlane.xlu0 %1033
        %v1035 = vsel %vm509, %v1031, 0.0
        %1036 = vadd.xlane.f32.xlu0 %v1035
        %v1037 = vpop.xlane.xlu0 %1036
        %v1038 = vsel %vm462, 0.0, %v1030
        %v1039 = vsel %vm462, 0.0, %v1031
        %v1040 = vrcp.pop %v1034
        %v1041 = vmul.f32 %v1034, %v1040
        %v1042 = vsub.f32 1.0, %v1041
        %v1043 = vmul.f32 %v1040, %v1042
        %v1044 = vadd.f32 %v1040, %v1043
        %vm1045 = vweird.f32 %v1034
        %vm1046 = vweird.f32 %v1040
        %vm1047 = vmor %vm1045, %vm1046
        %v1048 = vsel %vm1047, %v1040, %v1044
        %v1049 = vand.u32 2147483647, %v1034
        %vm1050 = vcmp.eq.f32.partialorder %v1049, 8.507059e+37
        %v1051 = vand.u32 %v1034, 2147483648
        %v1052 = vor.u32 1.1754944e-38, %v1051
        %v1053 = vsel %vm1050, %v1052, %v1048
        %v1054 = vmul.f32 1.0, %v1053
        %v1055 = vrcp.pop %v1037
        %v1056 = vmul.f32 %v1037, %v1055
        %v1057 = vsub.f32 1.0, %v1056
        %v1058 = vmul.f32 %v1055, %v1057
        %v1059 = vadd.f32 %v1055, %v1058
        %vm1060 = vweird.f32 %v1037
        %vm1061 = vweird.f32 %v1055
        %vm1062 = vmor %vm1060, %vm1061
        %v1063 = vsel %vm1062, %v1055, %v1059
        %v1064 = vand.u32 2147483647, %v1037
        %vm1065 = vcmp.eq.f32.partialorder %v1064, 8.507059e+37
        %v1066 = vand.u32 %v1037, 2147483648
        %v1067 = vor.u32 1.1754944e-38, %v1066
        %v1068 = vsel %vm1065, %v1067, %v1063
        %v1069 = vmul.f32 1.0, %v1068
        %v1070 = vmul.f32 %v1038, %v1054
        %v1071 = vmul.f32 %v1039, %v1069
        %1072 = vrot.lane.b32.xlu0 %v436, 112
        %v1073 = vpop.permute.xlu0 %1072
        %1074 = vrot.lane.b32.xlu0 %v439, 112
        %v1075 = vpop.permute.xlu0 %1074
        %1076 = vrot.lane.b32.xlu0 %v442, 112
        %v1077 = vpop.permute.xlu0 %1076
        %v1082 = vsel %vm509, %v1070, 0
        %v1085 = vsel %vm509, %v1071, 0
        %1087 = vmatpush.msra.mxu0 0.0
        %1088 = vmatpush.msra.mxu0 0.0
        %1089 = vmatpush.msra.mxu0 0.0
        %1090 = vmatpush.msra.mxu0 0.0
        %1091 = vmatpush.msra.mxu0 0.0
        %1092 = vmatpush.msra.mxu0 0.0
        %1093 = vmatpush.msra.mxu0 0.0
        %1094 = vmatpush.msra.mxu0 0.0
        %1095 = vmatpush.msra.mxu0 0.0
        %1096 = vmatpush.msra.mxu0 0.0
        %1097 = vmatpush.msra.mxu0 0.0
        %1098 = vmatpush.msra.mxu0 0.0
        %1099 = vmatpush.msra.mxu0 0.0
        %1100 = vmatpush.msra.mxu0 %v1077
        %1101 = vmatpush.msra.mxu0 %v1075
        %1102 = vmatpush.msra.mxu0 %v1073
        %1103 = vmatmul.f32.gmra.mxu0 %v1082
        %v1104 = vpop.f32.mrf.mxu0
        %v1105 = vadd.f32 0.0, %v1104
        %1106 = vmatmul.f32.gmra.mxu0 %v1085
        %v1107 = vpop.f32.mrf.mxu0
        %v1108 = vadd.f32 0.0, %v1107
        %1109 = vdwg.mxu0
        %s1110 = scalar_lea.vmem %s3, 24
        %v1111 = vld [vmem:[%s1110] sm:$0xff]
        %v1113 = vsel %vm354, %v1105, 0
        %v1116 = vsel %vm354, %v1108, 0
        %1118 = vmatpush.msra.mxu0 0.0
        %1119 = vmatpush.msra.mxu0 0.0
        %1120 = vmatpush.msra.mxu0 0.0
        %1121 = vmatpush.msra.mxu0 0.0
        %1122 = vmatpush.msra.mxu0 0.0
        %1123 = vmatpush.msra.mxu0 0.0
        %1124 = vmatpush.msra.mxu0 0.0
        %1125 = vmatpush.msra.mxu0 0.0
        %1126 = vmatpush.msra.mxu0 0.0
        %1127 = vmatpush.msra.mxu0 0.0
        %1128 = vmatpush.msra.mxu0 0.0
        %1129 = vmatpush.msra.mxu0 0.0
        %1130 = vmatpush.msra.mxu0 0.0
        %1131 = vmatpush.msra.mxu0 0.0
        %1132 = vmatpush.msra.mxu0 0.0
        %1133 = vmatpush.msra.mxu0 %v1111
        %1134 = vmatmul.f32.gmra.mxu0 %v1113
        %v1135 = vpop.f32.mrf.mxu0
        %v1136 = vadd.f32 0.0, %v1135
        %1137 = vmatmul.f32.gmra.mxu0 %v1116
        %v1138 = vpop.f32.mrf.mxu0
        %v1139 = vadd.f32 0.0, %v1138
        %1140 = vdwg.mxu0
        %v1141 = vadd.f32 %v970, %v1136
        %v1142 = vadd.f32 %v971, %v1139
        %v1143 = vld [vmem:[%s4] sm:$0x1]
        %v1145 = vperm.slane %v1143, 0
        %v1147 = vadd.f32 %v1141, %v1145
        %v1148 = vadd.f32 %v1142, %v1145
        %vm1149 = vcmask 261120
        %1150 = vst.msk [vmem:[%s325] sm:$0xff] %vm1149, %v1147
        %1151 = vst.msk [vmem:[%s325 + $0x8] sm:$0xff] %vm1149, %v1148
        %s1152 = sand.u32 %s168, 1
        %s1153 = scalar_lea.sflag [#allocation4], %s1152
        %s1154 = sand.u32 %s168, 1
        %s1155 = smul.addr %s1154, 16
        %s1156 = scalar_lea.vmem [#allocation3], %s1155
        // Predicated region
        $region79: #{tpu_custom_call.1} parent=73 // pred_check
          %p1157 = pneg %p178
        $region80: #{tpu_custom_call.1} parent=73 // pred_check_branch
          %1159 = sbr.rel (%p1157) target = $region82
        $region81: #{tpu_custom_call.1} parent=73 // pred_region
          %s1160 = smul.u32 2, %s24
          %1162 = vsyncadd %s1153, 0
          %s1163 = smul.addr %s23, 2
          %s1164 = sadd.s32 %s1160, %s1163
          %s1165 = smul.addr %s1164, 8
          %s1166 = scalar_lea.hbm %s5, %s1165
          %s1167 = sshll.u32 %s1156, 4
          %s1168 = int_to_ptr.vmem [resolvable:$true] %s1167
          %s1169 = sshll.u32 %s1166, 4
          %s1170 = int_to_ptr.hbm [resolvable:$true] %s1169
          %1175 = dma.vmem_to_hbm [thread:$0]  %s1168, 256, %s1170, %s1153, 128, 128, 8
        $region82: #{tpu_custom_call.1} parent=73 // pred_fallthru
          _
      $region74: #{tpu_custom_call.1} parent=5 // pred_fallthru
        _
      %p1176 = scmp.le.s32.totalorder 2, %s14
      // Predicated region
      $region83: #{tpu_custom_call.1} parent=5 // pred_check
        %p1177 = pneg %p1176
      $region84: #{tpu_custom_call.1} parent=5 // pred_check_branch
        %1179 = sbr.rel (%p1177) target = $region86
      $region85: #{tpu_custom_call.1} parent=5 // pred_region
        %s1180 = ssub.s32 %s14, 2
        // Predicated region
        $region87: #{tpu_custom_call.1} parent=85 // pred_check
          %p1181 = pneg %p184
        $region88: #{tpu_custom_call.1} parent=85 // pred_check_branch
          %1183 = sbr.rel (%p1181) target = $region90
        $region89: #{tpu_custom_call.1} parent=85 // pred_region
          %s1184 = sand.u32 %s169, 1
          %s1185 = scalar_lea.sflag [#allocation4], %s1184
          %s1186 = sand.u32 %s169, 1
          %s1187 = smul.addr %s1186, 16
          %s1188 = scalar_lea.vmem [#allocation3], %s1187
          %1190 = dma.done %s1185, 256
        $region90: #{tpu_custom_call.1} parent=85 // pred_fallthru
          _
      $region86: #{tpu_custom_call.1} parent=5 // pred_fallthru
        _
    $region6: #{tpu_custom_call.1} parent=1 // loop_footer
      %s18 = sadd.s32 1, %s14
    $region7: #{tpu_custom_call.1} parent=1 // loop_footer_branch
      %13 = sbr.rel target = $region3
    $region8: #{tpu_custom_call.1} parent=1 // loop_exit
      _
    %1191 = vsyncpa [#allocation4], 1
    %s1192 = scalar_lea.sflag [#allocation4], 1
    %1193 = vsyncpa %s1192, 1

</llo_original>
